<compile_context>
chip_gen: v7x
topology: tpu7x:2x2x1
jax: 0.10.0
libtpu: 0.0.40
codegen_flags: <defaults>
</compile_context>

<pallas_src>
import jax
import jax.numpy as jnp
from jax.experimental import pallas as pl
from jax.experimental.pallas import tpu as pltpu

NEG_SLOPE = 0.01   # nn.LeakyReLU default negative_slope
DROP_P = 0.5       # nn.Dropout(0.5)


def _leaky_relu(x):
    return jnp.where(x >= 0, x, NEG_SLOPE * x)


def siamese_kernel(q_ref,      # (2B, Q)        stacked [q_pos; q_neg]
                   ctx_ref,    # (2B, CTX_IN)   context tiled twice
                   mask_ref,   # (2B, 1024)     dropout mask, values in {0, 1/(1-p)}
                   w1q_ref,    # (Q, 1024)      linear_1 slice acting on query
                   w1c_ref,    # (CTX_IN, 1024) encoder folded into linear_1
                   b1_ref,     # (1, 1024)      fused bias (be @ W1c + b1)
                   w2_ref,     # (1024, 128)
                   b2_ref,     # (1, 128)
                   w3_ref,     # (1, 128)       w3 transposed to a lane row
                   out_ref):   # (B, 1)
    # linear_1 on the stacked batch (concat realized as a split matmul)
    h1 = (jnp.dot(q_ref[...], w1q_ref[...], preferred_element_type=jnp.float32)
          + jnp.dot(ctx_ref[...], w1c_ref[...], preferred_element_type=jnp.float32)
          + b1_ref[...])
    # training-mode dropout (scale already fused into the mask), then LeakyReLU
    h1 = _leaky_relu(h1 * mask_ref[...])
    # linear_2 + LeakyReLU
    h2 = _leaky_relu(
        jnp.dot(h1, w2_ref[...], preferred_element_type=jnp.float32)
        + b2_ref[...])
    # linear_3 as a VPU/XLU reduction on the branch difference; b3 cancels exactly
    B = out_ref.shape[0]
    d = h2[:B] - h2[B:]                                   # (B, 128)
    out_ref[...] = jnp.sum(d * w3_ref[...], axis=-1, keepdims=True)
    # TODO(synk): eval path (train=False) would skip the neg half and make
    # dropout the identity; only the training hot path is implemented here.


def kernel_siamese_forward(params, context, q_pos, q_neg, dropout_key):
    B = context.shape[0]
    H1 = params["w1q"].shape[1]

    # ---- host-side prep (pure layout / exact algebra, all tiny) -------------
    q_stk = jnp.concatenate([q_pos, q_neg], axis=0)            # (2B, Q)
    ctx_stk = jnp.concatenate([context, context], axis=0)      # (2B, CTX_IN)

    # fold the (linear) context encoder into linear_1
    w1c_fused = params["we"] @ params["w1c"]                   # (CTX_IN, 1024)
    b_fused = params["be"] @ params["w1c"] + params["b1"]      # (1, 1024)
    w3_row = params["w3"].T                                    # (1, 128)

    # one dropout mask for the stacked batch == two independent nn.Dropout calls
    keep = jax.random.bernoulli(dropout_key, 1.0 - DROP_P, (2 * B, H1))
    drop_mask = keep.astype(jnp.float32) * (1.0 / (1.0 - DROP_P))

    dense_inputs = [
        q_stk, ctx_stk, drop_mask,
        params["w1q"], w1c_fused, b_fused,
        params["w2"], params["b2"],
        w3_row,
    ]
    # every operand is a single full-array block (shapes are small)
    in_specs = [pl.BlockSpec(x.shape, lambda i: (0, 0)) for x in dense_inputs]

    grid_spec = pltpu.PrefetchScalarGridSpec(
        num_scalar_prefetch=0,
        grid=(1,),
        in_specs=in_specs,
        out_specs=pl.BlockSpec((B, 1), lambda i: (0, 0)),
    )

    return pl.pallas_call(
        siamese_kernel,
        out_shape=jax.ShapeDtypeStruct((B, 1), jnp.float32),
        grid_spec=grid_spec,
        compiler_params=pltpu.CompilerParams(
            dimension_semantics=("arbitrary",)),
    )(*dense_inputs)


def init_params(key, context_in_dim, context_dim, query_dim, h1=1024, h2=128):
    ks = jax.random.split(key, 8)
    scale = 0.05
    in_dim = context_dim + query_dim
    w1 = scale * jax.random.normal(ks[0], (in_dim, h1), jnp.float32)
    return {
        # synthetic context encoder: Linear(context_in_dim -> context_dim)
        "we":  scale * jax.random.normal(ks[1], (context_in_dim, context_dim), jnp.float32),
        "be":  scale * jax.random.normal(ks[2], (1, context_dim), jnp.float32),
        # linear_1, split along the concat axis: [query | context_repr]
        "w1q": w1[:query_dim],
        "w1c": w1[query_dim:],
        "b1":  scale * jax.random.normal(ks[3], (1, h1), jnp.float32),
        # linear_2
        "w2":  scale * jax.random.normal(ks[4], (h1, h2), jnp.float32),
        "b2":  scale * jax.random.normal(ks[5], (1, h2), jnp.float32),
        # linear_3  (b3 is omitted: it cancels exactly in score_pos - score_neg)
        "w3":  scale * jax.random.normal(ks[6], (h2, 1), jnp.float32),
        "b3":  scale * jax.random.normal(ks[7], (1, 1), jnp.float32),
    }


if __name__ == "__main__":
    key = jax.random.PRNGKey(0)
    B, CTX_IN, CTX_DIM, Q_DIM = 8, 32, 16, 16

    k_ctx, k_pos, k_neg, k_par, k_drop = jax.random.split(key, 5)
    context = jax.random.normal(k_ctx, (B, CTX_IN), jnp.float32)
    q_pos = jax.random.normal(k_pos, (B, Q_DIM), jnp.float32)
    q_neg = jax.random.normal(k_neg, (B, Q_DIM), jnp.float32)
    params = init_params(k_par, CTX_IN, CTX_DIM, Q_DIM)

    out = kernel_siamese_forward(params, context, q_pos, q_neg, k_drop)
    out = jax.block_until_ready(out)
    assert out.shape == (B, 1) and out.dtype == jnp.float32
    assert bool(jnp.all(jnp.isfinite(out)))
    print("KERNEL_OK")
</pallas_src>

<mosaic_0001>
module attributes {stable_mosaic.version = 11 : i64} {
  func.func @siamese_kernel(%arg0: i32, %arg1: memref<16x16xf32, #tpu.memory_space<vmem>>, %arg2: memref<16x32xf32, #tpu.memory_space<vmem>>, %arg3: memref<16x1024xf32, #tpu.memory_space<vmem>>, %arg4: memref<16x1024xf32, #tpu.memory_space<vmem>>, %arg5: memref<32x1024xf32, #tpu.memory_space<vmem>>, %arg6: memref<1x1024xf32, #tpu.memory_space<vmem>>, %arg7: memref<1024x128xf32, #tpu.memory_space<vmem>>, %arg8: memref<1x128xf32, #tpu.memory_space<vmem>>, %arg9: memref<1x128xf32, #tpu.memory_space<vmem>>, %arg10: memref<8x1xf32, #tpu.memory_space<vmem>>) attributes {dimension_semantics = [#tpu.dimension_semantics<arbitrary>], iteration_bounds = array<i64: 1>, scalar_prefetch = 0 : i64, scratch_operands = 0 : i64, tpu.core_type = #tpu.core_type<tc>, window_params = [{pipeline_mode = #tpu.pipeline_mode<synchronous>, transform_indices = @transform_0, window_bounds = array<i64: 16, 16>}, {pipeline_mode = #tpu.pipeline_mode<synchronous>, transform_indices = @transform_1, window_bounds = array<i64: 16, 32>}, {pipeline_mode = #tpu.pipeline_mode<synchronous>, transform_indices = @transform_2, window_bounds = array<i64: 16, 1024>}, {pipeline_mode = #tpu.pipeline_mode<synchronous>, transform_indices = @transform_3, window_bounds = array<i64: 16, 1024>}, {pipeline_mode = #tpu.pipeline_mode<synchronous>, transform_indices = @transform_4, window_bounds = array<i64: 32, 1024>}, {pipeline_mode = #tpu.pipeline_mode<synchronous>, transform_indices = @transform_5, window_bounds = array<i64: 1, 1024>}, {pipeline_mode = #tpu.pipeline_mode<synchronous>, transform_indices = @transform_6, window_bounds = array<i64: 1024, 128>}, {pipeline_mode = #tpu.pipeline_mode<synchronous>, transform_indices = @transform_7, window_bounds = array<i64: 1, 128>}, {pipeline_mode = #tpu.pipeline_mode<synchronous>, transform_indices = @transform_8, window_bounds = array<i64: 1, 128>}, {pipeline_mode = #tpu.pipeline_mode<synchronous>, transform_indices = @transform_9, window_bounds = array<i64: 8, 1>}]} {
    %c0 = arith.constant 0 : index
    %c0_0 = arith.constant 0 : index
    %0 = vector.load %arg1[%c0, %c0_0] : memref<16x16xf32, #tpu.memory_space<vmem>>, vector<16x16xf32>
    %c0_1 = arith.constant 0 : index
    %c0_2 = arith.constant 0 : index
    %1 = vector.load %arg4[%c0_1, %c0_2] : memref<16x1024xf32, #tpu.memory_space<vmem>>, vector<16x1024xf32>
    %cst = arith.constant dense<0.000000e+00> : vector<16x1024xf32>
    %2 = tpu.matmul %0, %1, %cst {dimension_numbers = #tpu.dot_dimension_numbers<[1], [0], [0], [1], [0, 0, 1, 1], [], []>} : vector<16x16xf32>, vector<16x1024xf32>, vector<16x1024xf32> -> vector<16x1024xf32>
    %c0_3 = arith.constant 0 : index
    %c0_4 = arith.constant 0 : index
    %3 = vector.load %arg2[%c0_3, %c0_4] : memref<16x32xf32, #tpu.memory_space<vmem>>, vector<16x32xf32>
    %c0_5 = arith.constant 0 : index
    %c0_6 = arith.constant 0 : index
    %4 = vector.load %arg5[%c0_5, %c0_6] : memref<32x1024xf32, #tpu.memory_space<vmem>>, vector<32x1024xf32>
    %cst_7 = arith.constant dense<0.000000e+00> : vector<16x1024xf32>
    %5 = tpu.matmul %3, %4, %cst_7 {dimension_numbers = #tpu.dot_dimension_numbers<[1], [0], [0], [1], [0, 0, 1, 1], [], []>} : vector<16x32xf32>, vector<32x1024xf32>, vector<16x1024xf32> -> vector<16x1024xf32>
    %6 = arith.addf %2, %5 : vector<16x1024xf32>
    %c0_8 = arith.constant 0 : index
    %c0_9 = arith.constant 0 : index
    %7 = vector.load %arg6[%c0_8, %c0_9] : memref<1x1024xf32, #tpu.memory_space<vmem>>, vector<1x1024xf32>
    %8 = vector.broadcast %7 : vector<1x1024xf32> to vector<16x1024xf32>
    %9 = arith.addf %6, %8 : vector<16x1024xf32>
    %c0_10 = arith.constant 0 : index
    %c0_11 = arith.constant 0 : index
    %10 = vector.load %arg3[%c0_10, %c0_11] : memref<16x1024xf32, #tpu.memory_space<vmem>>, vector<16x1024xf32>
    %11 = arith.mulf %9, %10 : vector<16x1024xf32>
    %cst_12 = arith.constant 0.000000e+00 : f32
    %12 = vector.broadcast %cst_12 : f32 to vector<16x1024xf32>
    %13 = arith.cmpf oge, %11, %12 : vector<16x1024xf32>
    %cst_13 = arith.constant 0.00999999977 : f32
    %14 = vector.broadcast %cst_13 : f32 to vector<16x1024xf32>
    %15 = arith.mulf %14, %11 : vector<16x1024xf32>
    %16 = arith.select %13, %11, %15 : vector<16x1024xi1>, vector<16x1024xf32>
    %c0_14 = arith.constant 0 : index
    %c0_15 = arith.constant 0 : index
    %17 = vector.load %arg7[%c0_14, %c0_15] : memref<1024x128xf32, #tpu.memory_space<vmem>>, vector<1024x128xf32>
    %cst_16 = arith.constant dense<0.000000e+00> : vector<16x128xf32>
    %18 = tpu.matmul %16, %17, %cst_16 {dimension_numbers = #tpu.dot_dimension_numbers<[1], [0], [0], [1], [0, 0, 1, 1], [], []>} : vector<16x1024xf32>, vector<1024x128xf32>, vector<16x128xf32> -> vector<16x128xf32>
    %c0_17 = arith.constant 0 : index
    %c0_18 = arith.constant 0 : index
    %19 = vector.load %arg8[%c0_17, %c0_18] : memref<1x128xf32, #tpu.memory_space<vmem>>, vector<1x128xf32>
    %20 = vector.broadcast %19 : vector<1x128xf32> to vector<16x128xf32>
    %21 = arith.addf %18, %20 : vector<16x128xf32>
    %cst_19 = arith.constant 0.000000e+00 : f32
    %22 = vector.broadcast %cst_19 : f32 to vector<16x128xf32>
    %23 = arith.cmpf oge, %21, %22 : vector<16x128xf32>
    %cst_20 = arith.constant 0.00999999977 : f32
    %24 = vector.broadcast %cst_20 : f32 to vector<16x128xf32>
    %25 = arith.mulf %24, %21 : vector<16x128xf32>
    %26 = arith.select %23, %21, %25 : vector<16x128xi1>, vector<16x128xf32>
    %27 = vector.extract_strided_slice %26 {offsets = [0, 0], sizes = [8, 128], strides = [1, 1]} : vector<16x128xf32> to vector<8x128xf32>
    %28 = vector.extract_strided_slice %26 {offsets = [8, 0], sizes = [8, 128], strides = [1, 1]} : vector<16x128xf32> to vector<8x128xf32>
    %29 = arith.subf %27, %28 : vector<8x128xf32>
    %c0_21 = arith.constant 0 : index
    %c0_22 = arith.constant 0 : index
    %30 = vector.load %arg9[%c0_21, %c0_22] : memref<1x128xf32, #tpu.memory_space<vmem>>, vector<1x128xf32>
    %31 = vector.broadcast %30 : vector<1x128xf32> to vector<8x128xf32>
    %32 = arith.mulf %29, %31 : vector<8x128xf32>
    %cst_23 = arith.constant dense<0.000000e+00> : vector<8xf32>
    %33 = vector.multi_reduction <add>, %32, %cst_23 [1] : vector<8x128xf32> to vector<8xf32>
    %34 = vector.shape_cast %33 : vector<8xf32> to vector<8x1xf32>
    %c0_24 = arith.constant 0 : index
    %c0_25 = arith.constant 0 : index
    %35 = vector.load %arg10[%c0_24, %c0_25] : memref<8x1xf32, #tpu.memory_space<vmem>>, vector<8x1xf32>
    tpu.vector_store %arg10[%c0_24, %c0_25], %34 {strides = array<i32>} : memref<8x1xf32, #tpu.memory_space<vmem>>, vector<8x1xf32>,
    return
  }
  func.func @transform_0(%arg0: i32) -> (i32, i32) {
    %c0_i32 = arith.constant 0 : i32
    %c0_i32_0 = arith.constant 0 : i32
    %c0_i32_1 = arith.constant 0 : i32
    return %c0_i32, %c0_i32_0 : i32, i32
  }
  func.func @transform_1(%arg0: i32) -> (i32, i32) {
    %c0_i32 = arith.constant 0 : i32
    %c0_i32_0 = arith.constant 0 : i32
    %c0_i32_1 = arith.constant 0 : i32
    return %c0_i32, %c0_i32_0 : i32, i32
  }
  func.func @transform_2(%arg0: i32) -> (i32, i32) {
    %c0_i32 = arith.constant 0 : i32
    %c0_i32_0 = arith.constant 0 : i32
    %c0_i32_1 = arith.constant 0 : i32
    return %c0_i32, %c0_i32_0 : i32, i32
  }
  func.func @transform_3(%arg0: i32) -> (i32, i32) {
    %c0_i32 = arith.constant 0 : i32
    %c0_i32_0 = arith.constant 0 : i32
    %c0_i32_1 = arith.constant 0 : i32
    return %c0_i32, %c0_i32_0 : i32, i32
  }
  func.func @transform_4(%arg0: i32) -> (i32, i32) {
    %c0_i32 = arith.constant 0 : i32
    %c0_i32_0 = arith.constant 0 : i32
    %c0_i32_1 = arith.constant 0 : i32
    return %c0_i32, %c0_i32_0 : i32, i32
  }
  func.func @transform_5(%arg0: i32) -> (i32, i32) {
    %c0_i32 = arith.constant 0 : i32
    %c0_i32_0 = arith.constant 0 : i32
    %c0_i32_1 = arith.constant 0 : i32
    return %c0_i32, %c0_i32_0 : i32, i32
  }
  func.func @transform_6(%arg0: i32) -> (i32, i32) {
    %c0_i32 = arith.constant 0 : i32
    %c0_i32_0 = arith.constant 0 : i32
    %c0_i32_1 = arith.constant 0 : i32
    return %c0_i32, %c0_i32_0 : i32, i32
  }
  func.func @transform_7(%arg0: i32) -> (i32, i32) {
    %c0_i32 = arith.constant 0 : i32
    %c0_i32_0 = arith.constant 0 : i32
    %c0_i32_1 = arith.constant 0 : i32
    return %c0_i32, %c0_i32_0 : i32, i32
  }
  func.func @transform_8(%arg0: i32) -> (i32, i32) {
    %c0_i32 = arith.constant 0 : i32
    %c0_i32_0 = arith.constant 0 : i32
    %c0_i32_1 = arith.constant 0 : i32
    return %c0_i32, %c0_i32_0 : i32, i32
  }
  func.func @transform_9(%arg0: i32) -> (i32, i32) {
    %c0_i32 = arith.constant 0 : i32
    %c0_i32_0 = arith.constant 0 : i32
    %c0_i32_1 = arith.constant 0 : i32
    return %c0_i32, %c0_i32_0 : i32, i32
  }
}

</mosaic_0001>

<llo_original>
// kernel: tpu_custom_call.1
$region0: #{tpu_custom_call.1}
  #allocation0 [shape = 'u32[]', space=smem, size = 0x4, offset = 0x4, fixed_abs, tag = 'smem constant byte address 0x4 - core index']
  #allocation1 [shape = 'u32[144,128]{1,0:T(1,128)}', space=vmem, size = 0x12000, scoped, tag = 'internal scratch']
  %s0 = inlined_call_operand.hbm [shape: f32[16,16], index: 0, kind: input, shape index: {}]
  %s1 = inlined_call_operand.hbm [shape: f32[16,32], index: 1, kind: input, shape index: {}]
  %s2 = inlined_call_operand.hbm [shape: f32[16,1024], index: 2, kind: input, shape index: {}]
  %s3 = inlined_call_operand.hbm [shape: f32[16,1024], index: 3, kind: input, shape index: {}]
  %s4 = inlined_call_operand.hbm [shape: f32[32,1024], index: 4, kind: input, shape index: {}]
  %s5 = inlined_call_operand.vmem [shape: f32[1,1024], index: 5, kind: input, shape index: {}]
  %s6 = inlined_call_operand.hbm [shape: f32[1024,128], index: 6, kind: input, shape index: {}]
  %s7 = inlined_call_operand.vmem [shape: f32[1,128], index: 7, kind: input, shape index: {}]
  %s8 = inlined_call_operand.vmem [shape: f32[1,128], index: 8, kind: input, shape index: {}]
  %s9 = inlined_call_operand.vmem [shape: f32[8,1], index: 9, kind: output, shape index: {}]
  %s10 = sld [smem:[#allocation0]]
  $region70: #{tpu_custom_call.1} parent=0
    _
  %s12 = ssub.s32 1, %s10
  %s13 = scalar_select 0, %s12, %s10
  $region1: #{tpu_custom_call.1} parent=0
    #allocation2 [shape = 'u8[8192]{0}', space=vmem, size = 0x2000, scoped, tag = 'input window, operand 0, single buffered']
    #allocation3 [shape = 's32[1]{0}', space=sflag, size = 0x4, scoped, tag = 'scoped memory for tpu_custom_call.1']
    #allocation4 [shape = 'u8[8192]{0}', space=vmem, size = 0x2000, scoped, tag = 'input window, operand 1, single buffered']
    #allocation5 [shape = 's32[1]{0}', space=sflag, size = 0x4, scoped, tag = 'scoped memory for tpu_custom_call.1']
    #allocation6 [shape = 'u8[65536]{0}', space=vmem, size = 0x10000, scoped, tag = 'input window, operand 2, single buffered']
    #allocation7 [shape = 'u8[65536]{0}', space=vmem, size = 0x10000, scoped, tag = 'input window, operand 3, single buffered']
    #allocation8 [shape = 's32[1]{0}', space=sflag, size = 0x4, scoped, tag = 'scoped memory for tpu_custom_call.1']
    #allocation9 [shape = 'u8[131072]{0}', space=vmem, size = 0x20000, scoped, tag = 'input window, operand 4, single buffered']
    #allocation10 [shape = 'u8[524288]{0}', space=vmem, size = 0x80000, scoped, tag = 'input window, operand 6, single buffered']
    #allocation11 [shape = 's32[1]{0}', space=sflag, size = 0x4, scoped, tag = 'scoped memory for tpu_custom_call.1']
    %14 = vsyncpa [#allocation3], 0
    %15 = vsyncpa [#allocation5], 0
    %16 = vsyncpa [#allocation8], 0
    %17 = vsyncpa [#allocation11], 0
    // Predicated region
    $region2: #{tpu_custom_call.1} parent=1 // pred_check
      _
    $region3: #{tpu_custom_call.1} parent=1 // pred_check_branch
      %19 = sbr.rel (0) target = $region5
    $region4: #{tpu_custom_call.1} parent=1 // pred_region
      %s21 = ssub.s32 256, 256
      %22 = vsyncadd [#allocation3], %s21
      %s23 = sshll.u32 [#allocation2], 4
      %s24 = int_to_ptr.vmem [resolvable:$true] %s23
      %29 = dma.hbm_to_vmem [thread:$0]  %s0, 256, %s24, [#allocation3], 128, 128, 8
    $region5: #{tpu_custom_call.1} parent=1 // pred_fallthru
      _
    // Predicated region
    $region6: #{tpu_custom_call.1} parent=1 // pred_check
      _
    $region7: #{tpu_custom_call.1} parent=1 // pred_check_branch
      %31 = sbr.rel (0) target = $region9
    $region8: #{tpu_custom_call.1} parent=1 // pred_region
      %s33 = ssub.s32 256, 256
      %34 = vsyncadd [#allocation5], %s33
      %s35 = sshll.u32 [#allocation4], 4
      %s36 = int_to_ptr.vmem [resolvable:$true] %s35
      %41 = dma.hbm_to_vmem [thread:$0]  %s1, 256, %s36, [#allocation5], 128, 128, 8
    $region9: #{tpu_custom_call.1} parent=1 // pred_fallthru
      _
    // Predicated region
    $region10: #{tpu_custom_call.1} parent=1 // pred_check
      _
    $region11: #{tpu_custom_call.1} parent=1 // pred_check_branch
      %43 = sbr.rel (0) target = $region13
    $region12: #{tpu_custom_call.1} parent=1 // pred_region
      %s45 = ssub.s32 2048, 2048
      %46 = vsyncadd [#allocation5], %s45
      %s47 = sshll.u32 [#allocation6], 4
      %s48 = int_to_ptr.vmem [resolvable:$true] %s47
      %53 = dma.hbm_to_vmem [thread:$0]  %s2, 2048, %s48, [#allocation5], 1024, 1024, 64
    $region13: #{tpu_custom_call.1} parent=1 // pred_fallthru
      _
    // Predicated region
    $region14: #{tpu_custom_call.1} parent=1 // pred_check
      _
    $region15: #{tpu_custom_call.1} parent=1 // pred_check_branch
      %55 = sbr.rel (0) target = $region17
    $region16: #{tpu_custom_call.1} parent=1 // pred_region
      %s57 = ssub.s32 2048, 2048
      %58 = vsyncadd [#allocation8], %s57
      %s59 = sshll.u32 [#allocation7], 4
      %s60 = int_to_ptr.vmem [resolvable:$true] %s59
      %65 = dma.hbm_to_vmem [thread:$0]  %s3, 2048, %s60, [#allocation8], 1024, 1024, 64
    $region17: #{tpu_custom_call.1} parent=1 // pred_fallthru
      _
    // Predicated region
    $region18: #{tpu_custom_call.1} parent=1 // pred_check
      _
    $region19: #{tpu_custom_call.1} parent=1 // pred_check_branch
      %67 = sbr.rel (0) target = $region21
    $region20: #{tpu_custom_call.1} parent=1 // pred_region
      %s69 = ssub.s32 4096, 4096
      %70 = vsyncadd [#allocation8], %s69
      %s71 = sshll.u32 [#allocation9], 4
      %s72 = int_to_ptr.vmem [resolvable:$true] %s71
      %77 = dma.hbm_to_vmem [thread:$0]  %s4, 4096, %s72, [#allocation8], 1024, 1024, 64
    $region21: #{tpu_custom_call.1} parent=1 // pred_fallthru
      _
    // Predicated region
    $region22: #{tpu_custom_call.1} parent=1 // pred_check
      _
    $region23: #{tpu_custom_call.1} parent=1 // pred_check_branch
      %79 = sbr.rel (0) target = $region25
    $region24: #{tpu_custom_call.1} parent=1 // pred_region
      _
    $region25: #{tpu_custom_call.1} parent=1 // pred_fallthru
      _
    // Predicated region
    $region26: #{tpu_custom_call.1} parent=1 // pred_check
      _
    $region27: #{tpu_custom_call.1} parent=1 // pred_check_branch
      %81 = sbr.rel (0) target = $region29
    $region28: #{tpu_custom_call.1} parent=1 // pred_region
      %s83 = ssub.s32 16384, 16384
      %84 = vsyncadd [#allocation11], %s83
      %s85 = sshll.u32 [#allocation10], 4
      %s86 = int_to_ptr.vmem [resolvable:$true] %s85
      %91 = dma.hbm_to_vmem [thread:$0]  %s6, 16384, %s86, [#allocation11], 128, 128, 8
    $region29: #{tpu_custom_call.1} parent=1 // pred_fallthru
      _
    // Predicated region
    $region30: #{tpu_custom_call.1} parent=1 // pred_check
      _
    $region31: #{tpu_custom_call.1} parent=1 // pred_check_branch
      %93 = sbr.rel (0) target = $region33
    $region32: #{tpu_custom_call.1} parent=1 // pred_region
      _
    $region33: #{tpu_custom_call.1} parent=1 // pred_fallthru
      _
    // Predicated region
    $region34: #{tpu_custom_call.1} parent=1 // pred_check
      _
    $region35: #{tpu_custom_call.1} parent=1 // pred_check_branch
      %95 = sbr.rel (0) target = $region37
    $region36: #{tpu_custom_call.1} parent=1 // pred_region
      _
    $region37: #{tpu_custom_call.1} parent=1 // pred_fallthru
      _
    // Predicated region
    $region38: #{tpu_custom_call.1} parent=1 // pred_check
      _
    $region39: #{tpu_custom_call.1} parent=1 // pred_check_branch
      %97 = sbr.rel (0) target = $region41
    $region40: #{tpu_custom_call.1} parent=1 // pred_region
      %98 = dma.done [#allocation3], 256
    $region41: #{tpu_custom_call.1} parent=1 // pred_fallthru
      _
    // Predicated region
    $region42: #{tpu_custom_call.1} parent=1 // pred_check
      _
    $region43: #{tpu_custom_call.1} parent=1 // pred_check_branch
      %100 = sbr.rel (0) target = $region45
    $region44: #{tpu_custom_call.1} parent=1 // pred_region
      %101 = dma.done [#allocation5], 256
    $region45: #{tpu_custom_call.1} parent=1 // pred_fallthru
      _
    // Predicated region
    $region46: #{tpu_custom_call.1} parent=1 // pred_check
      _
    $region47: #{tpu_custom_call.1} parent=1 // pred_check_branch
      %103 = sbr.rel (0) target = $region49
    $region48: #{tpu_custom_call.1} parent=1 // pred_region
      %104 = dma.done [#allocation5], 2048
    $region49: #{tpu_custom_call.1} parent=1 // pred_fallthru
      _
    // Predicated region
    $region50: #{tpu_custom_call.1} parent=1 // pred_check
      _
    $region51: #{tpu_custom_call.1} parent=1 // pred_check_branch
      %106 = sbr.rel (0) target = $region53
    $region52: #{tpu_custom_call.1} parent=1 // pred_region
      %107 = dma.done [#allocation8], 2048
    $region53: #{tpu_custom_call.1} parent=1 // pred_fallthru
      _
    // Predicated region
    $region54: #{tpu_custom_call.1} parent=1 // pred_check
      _
    $region55: #{tpu_custom_call.1} parent=1 // pred_check_branch
      %109 = sbr.rel (0) target = $region57
    $region56: #{tpu_custom_call.1} parent=1 // pred_region
      %110 = dma.done [#allocation8], 4096
    $region57: #{tpu_custom_call.1} parent=1 // pred_fallthru
      _
    // Predicated region
    $region58: #{tpu_custom_call.1} parent=1 // pred_check
      _
    $region59: #{tpu_custom_call.1} parent=1 // pred_check_branch
      %112 = sbr.rel (0) target = $region61
    $region60: #{tpu_custom_call.1} parent=1 // pred_region
      %113 = dma.done [#allocation11], 16384
    $region61: #{tpu_custom_call.1} parent=1 // pred_fallthru
      _
    %v114 = vld [vmem:[#allocation2] sm:$0xff]
    %v115 = vld [vmem:[#allocation2 + $0x8] sm:$0xff]
    %v116 = vld [vmem:[#allocation7] sm:$0xff]
    %v117 = vld [vmem:[#allocation7 + $0x8] sm:$0xff]
    %v118 = vld [vmem:[#allocation7 + $0x10] sm:$0xff]
    %v119 = vld [vmem:[#allocation7 + $0x18] sm:$0xff]
    %v120 = vld [vmem:[#allocation7 + $0x20] sm:$0xff]
    %v121 = vld [vmem:[#allocation7 + $0x28] sm:$0xff]
    %v122 = vld [vmem:[#allocation7 + $0x30] sm:$0xff]
    %v123 = vld [vmem:[#allocation7 + $0x38] sm:$0xff]
    %v124 = vld [vmem:[#allocation7 + $0x40] sm:$0xff]
    %v125 = vld [vmem:[#allocation7 + $0x48] sm:$0xff]
    %v126 = vld [vmem:[#allocation7 + $0x50] sm:$0xff]
    %v127 = vld [vmem:[#allocation7 + $0x58] sm:$0xff]
    %v128 = vld [vmem:[#allocation7 + $0x60] sm:$0xff]
    %v129 = vld [vmem:[#allocation7 + $0x68] sm:$0xff]
    %v130 = vld [vmem:[#allocation7 + $0x70] sm:$0xff]
    %v131 = vld [vmem:[#allocation7 + $0x78] sm:$0xff]
    %v132 = vld [vmem:[#allocation4] sm:$0xff]
    %v133 = vld [vmem:[#allocation4 + $0x8] sm:$0xff]
    %v134 = vld [vmem:[#allocation9] sm:$0xff]
    %v135 = vld [vmem:[#allocation9 + $0x8] sm:$0xff]
    %v136 = vld [vmem:[#allocation9 + $0x10] sm:$0xff]
    %v137 = vld [vmem:[#allocation9 + $0x18] sm:$0xff]
    %v138 = vld [vmem:[#allocation9 + $0x20] sm:$0xff]
    %v139 = vld [vmem:[#allocation9 + $0x28] sm:$0xff]
    %v140 = vld [vmem:[#allocation9 + $0x30] sm:$0xff]
    %v141 = vld [vmem:[#allocation9 + $0x38] sm:$0xff]
    %v142 = vld [vmem:[#allocation9 + $0x40] sm:$0xff]
    %v143 = vld [vmem:[#allocation9 + $0x48] sm:$0xff]
    %v144 = vld [vmem:[#allocation9 + $0x50] sm:$0xff]
    %v145 = vld [vmem:[#allocation9 + $0x58] sm:$0xff]
    %v146 = vld [vmem:[#allocation9 + $0x60] sm:$0xff]
    %v147 = vld [vmem:[#allocation9 + $0x68] sm:$0xff]
    %v148 = vld [vmem:[#allocation9 + $0x70] sm:$0xff]
    %v149 = vld [vmem:[#allocation9 + $0x78] sm:$0xff]
    %v150 = vld [vmem:[#allocation9 + $0x80] sm:$0xff]
    %v151 = vld [vmem:[#allocation9 + $0x88] sm:$0xff]
    %v152 = vld [vmem:[#allocation9 + $0x90] sm:$0xff]
    %v153 = vld [vmem:[#allocation9 + $0x98] sm:$0xff]
    %v154 = vld [vmem:[#allocation9 + $0xa0] sm:$0xff]
    %v155 = vld [vmem:[#allocation9 + $0xa8] sm:$0xff]
    %v156 = vld [vmem:[#allocation9 + $0xb0] sm:$0xff]
    %v157 = vld [vmem:[#allocation9 + $0xb8] sm:$0xff]
    %v158 = vld [vmem:[#allocation9 + $0xc0] sm:$0xff]
    %v159 = vld [vmem:[#allocation9 + $0xc8] sm:$0xff]
    %v160 = vld [vmem:[#allocation9 + $0xd0] sm:$0xff]
    %v161 = vld [vmem:[#allocation9 + $0xd8] sm:$0xff]
    %v162 = vld [vmem:[#allocation9 + $0xe0] sm:$0xff]
    %v163 = vld [vmem:[#allocation9 + $0xe8] sm:$0xff]
    %v164 = vld [vmem:[#allocation9 + $0xf0] sm:$0xff]
    %v165 = vld [vmem:[#allocation9 + $0xf8] sm:$0xff]
    %vm166 = vcmask 261120
    %v168 = vsel %vm166, %v132, 0
    %v171 = vsel %vm166, %v133, 0
    %173 = vmatprep.subr.mxu0 %v135
    %174 = vmatpush1.msra.mxu0 %v134
    %175 = vmatprep.subr.mxu0 %v143
    %176 = vmatpush1.msra.mxu0 %v142
    %177 = vmatprep.subr.mxu0 %v151
    %178 = vmatpush1.msra.mxu0 %v150
    %179 = vmatprep.subr.mxu0 %v159
    %180 = vmatpush1.msra.mxu0 %v158
    %181 = vmatprep.subr.mxu0 0.0
    %182 = vmatpush1.msra.mxu0 0.0
    %183 = vmatprep.subr.mxu0 0.0
    %184 = vmatpush1.msra.mxu0 0.0
    %185 = vmatprep.subr.mxu0 0.0
    %186 = vmatpush1.msra.mxu0 0.0
    %187 = vmatprep.subr.mxu0 0.0
    %188 = vmatpush1.msra.mxu0 0.0
    %189 = vmatprep.subr.mxu0 0.0
    %190 = vmatpush1.msra.mxu0 0.0
    %191 = vmatprep.subr.mxu0 0.0
    %192 = vmatpush1.msra.mxu0 0.0
    %193 = vmatprep.subr.mxu0 0.0
    %194 = vmatpush1.msra.mxu0 0.0
    %195 = vmatprep.subr.mxu0 0.0
    %196 = vmatpush1.msra.mxu0 0.0
    %197 = vmatprep.subr.mxu0 0.0
    %198 = vmatpush1.msra.mxu0 0.0
    %199 = vmatprep.subr.mxu0 0.0
    %200 = vmatpush1.msra.mxu0 0.0
    %201 = vmatprep.subr.mxu0 0.0
    %202 = vmatpush1.msra.mxu0 0.0
    %203 = vmatprep.subr.mxu0 0.0
    %204 = vmatpush1.msra.mxu0 0.0
    %205 = vmatprep.subr.mxu0 0.0
    %206 = vmatpush1.msra.mxu0 0.0
    %207 = vmatprep.subr.mxu0 0.0
    %208 = vmatpush1.msra.mxu0 0.0
    %209 = vmatprep.subr.mxu0 0.0
    %210 = vmatpush1.msra.mxu0 0.0
    %211 = vmatprep.subr.mxu0 0.0
    %212 = vmatpush1.msra.mxu0 0.0
    %213 = vmatprep.subr.mxu0 0.0
    %214 = vmatpush1.msra.mxu0 0.0
    %215 = vmatprep.subr.mxu0 0.0
    %216 = vmatpush1.msra.mxu0 0.0
    %217 = vmatprep.subr.mxu0 0.0
    %218 = vmatpush1.msra.mxu0 0.0
    %219 = vmatprep.subr.mxu0 0.0
    %220 = vmatpush1.msra.mxu0 0.0
    %221 = vmatprep.subr.mxu0 0.0
    %222 = vmatpush1.msra.mxu0 0.0
    %223 = vmatprep.subr.mxu0 0.0
    %224 = vmatpush1.msra.mxu0 0.0
    %225 = vmatprep.subr.mxu0 0.0
    %226 = vmatpush1.msra.mxu0 0.0
    %227 = vmatprep.subr.mxu0 0.0
    %228 = vmatpush1.msra.mxu0 0.0
    %229 = vmatprep.subr.mxu0 0.0
    %230 = vmatpush1.msra.mxu0 0.0
    %231 = vmatprep.subr.mxu0 0.0
    %232 = vmatpush1.msra.mxu0 0.0
    %233 = vmatprep.subr.mxu0 0.0
    %234 = vmatpush1.msra.mxu0 0.0
    %235 = vmatprep.subr.mxu0 0.0
    %236 = vmatpush1.msra.mxu0 0.0
    %237 = vmatprep.mubr.f32.mxu0 0.0
    %238 = vmatmul.mubr.f32.gmra.mrb[0].mxu0 %v168
    %v239 = vpop.f32.mrb[0].mxu0
    %v240 = vadd.f32 0.0, %v239
    %v241 = vpop.f32.mrb[0].mxu0
    %v242 = vadd.f32 0.0, %v241
    %243 = vmatprep.mubr.f32.mxu0 0.0
    %244 = vmatmul.mubr.f32.gmra.mrb[0].mxu0 %v171
    %v245 = vpop.f32.mrb[0].mxu0
    %v246 = vadd.f32 0.0, %v245
    %v247 = vpop.f32.mrb[0].mxu0
    %v248 = vadd.f32 0.0, %v247
    %249 = vdwg.mxu0
    %250 = vmatprep.subr.mxu0 %v137
    %251 = vmatpush1.msra.mxu0 %v136
    %252 = vmatprep.subr.mxu0 %v145
    %253 = vmatpush1.msra.mxu0 %v144
    %254 = vmatprep.subr.mxu0 %v153
    %255 = vmatpush1.msra.mxu0 %v152
    %256 = vmatprep.subr.mxu0 %v161
    %257 = vmatpush1.msra.mxu0 %v160
    %258 = vmatprep.subr.mxu0 0.0
    %259 = vmatpush1.msra.mxu0 0.0
    %260 = vmatprep.subr.mxu0 0.0
    %261 = vmatpush1.msra.mxu0 0.0
    %262 = vmatprep.subr.mxu0 0.0
    %263 = vmatpush1.msra.mxu0 0.0
    %264 = vmatprep.subr.mxu0 0.0
    %265 = vmatpush1.msra.mxu0 0.0
    %266 = vmatprep.subr.mxu0 0.0
    %267 = vmatpush1.msra.mxu0 0.0
    %268 = vmatprep.subr.mxu0 0.0
    %269 = vmatpush1.msra.mxu0 0.0
    %270 = vmatprep.subr.mxu0 0.0
    %271 = vmatpush1.msra.mxu0 0.0
    %272 = vmatprep.subr.mxu0 0.0
    %273 = vmatpush1.msra.mxu0 0.0
    %274 = vmatprep.subr.mxu0 0.0
    %275 = vmatpush1.msra.mxu0 0.0
    %276 = vmatprep.subr.mxu0 0.0
    %277 = vmatpush1.msra.mxu0 0.0
    %278 = vmatprep.subr.mxu0 0.0
    %279 = vmatpush1.msra.mxu0 0.0
    %280 = vmatprep.subr.mxu0 0.0
    %281 = vmatpush1.msra.mxu0 0.0
    %282 = vmatprep.subr.mxu0 0.0
    %283 = vmatpush1.msra.mxu0 0.0
    %284 = vmatprep.subr.mxu0 0.0
    %285 = vmatpush1.msra.mxu0 0.0
    %286 = vmatprep.subr.mxu0 0.0
    %287 = vmatpush1.msra.mxu0 0.0
    %288 = vmatprep.subr.mxu0 0.0
    %289 = vmatpush1.msra.mxu0 0.0
    %290 = vmatprep.subr.mxu0 0.0
    %291 = vmatpush1.msra.mxu0 0.0
    %292 = vmatprep.subr.mxu0 0.0
    %293 = vmatpush1.msra.mxu0 0.0
    %294 = vmatprep.subr.mxu0 0.0
    %295 = vmatpush1.msra.mxu0 0.0
    %296 = vmatprep.subr.mxu0 0.0
    %297 = vmatpush1.msra.mxu0 0.0
    %298 = vmatprep.subr.mxu0 0.0
    %299 = vmatpush1.msra.mxu0 0.0
    %300 = vmatprep.subr.mxu0 0.0
    %301 = vmatpush1.msra.mxu0 0.0
    %302 = vmatprep.subr.mxu0 0.0
    %303 = vmatpush1.msra.mxu0 0.0
    %304 = vmatprep.subr.mxu0 0.0
    %305 = vmatpush1.msra.mxu0 0.0
    %306 = vmatprep.subr.mxu0 0.0
    %307 = vmatpush1.msra.mxu0 0.0
    %308 = vmatprep.subr.mxu0 0.0
    %309 = vmatpush1.msra.mxu0 0.0
    %310 = vmatprep.subr.mxu0 0.0
    %311 = vmatpush1.msra.mxu0 0.0
    %312 = vmatprep.subr.mxu0 0.0
    %313 = vmatpush1.msra.mxu0 0.0
    %314 = vmatprep.mubr.f32.mxu0 0.0
    %315 = vmatmul.mubr.f32.gmra.mrb[0].mxu0 %v168
    %v316 = vpop.f32.mrb[0].mxu0
    %v317 = vadd.f32 0.0, %v316
    %v318 = vpop.f32.mrb[0].mxu0
    %v319 = vadd.f32 0.0, %v318
    %320 = vmatprep.mubr.f32.mxu0 0.0
    %321 = vmatmul.mubr.f32.gmra.mrb[0].mxu0 %v171
    %v322 = vpop.f32.mrb[0].mxu0
    %v323 = vadd.f32 0.0, %v322
    %v324 = vpop.f32.mrb[0].mxu0
    %v325 = vadd.f32 0.0, %v324
    %326 = vdwg.mxu0
    %327 = vmatprep.subr.mxu0 %v139
    %328 = vmatpush1.msra.mxu0 %v138
    %329 = vmatprep.subr.mxu0 %v147
    %330 = vmatpush1.msra.mxu0 %v146
    %331 = vmatprep.subr.mxu0 %v155
    %332 = vmatpush1.msra.mxu0 %v154
    %333 = vmatprep.subr.mxu0 %v163
    %334 = vmatpush1.msra.mxu0 %v162
    %335 = vmatprep.subr.mxu0 0.0
    %336 = vmatpush1.msra.mxu0 0.0
    %337 = vmatprep.subr.mxu0 0.0
    %338 = vmatpush1.msra.mxu0 0.0
    %339 = vmatprep.subr.mxu0 0.0
    %340 = vmatpush1.msra.mxu0 0.0
    %341 = vmatprep.subr.mxu0 0.0
    %342 = vmatpush1.msra.mxu0 0.0
    %343 = vmatprep.subr.mxu0 0.0
    %344 = vmatpush1.msra.mxu0 0.0
    %345 = vmatprep.subr.mxu0 0.0
    %346 = vmatpush1.msra.mxu0 0.0
    %347 = vmatprep.subr.mxu0 0.0
    %348 = vmatpush1.msra.mxu0 0.0
    %349 = vmatprep.subr.mxu0 0.0
    %350 = vmatpush1.msra.mxu0 0.0
    %351 = vmatprep.subr.mxu0 0.0
    %352 = vmatpush1.msra.mxu0 0.0
    %353 = vmatprep.subr.mxu0 0.0
    %354 = vmatpush1.msra.mxu0 0.0
    %355 = vmatprep.subr.mxu0 0.0
    %356 = vmatpush1.msra.mxu0 0.0
    %357 = vmatprep.subr.mxu0 0.0
    %358 = vmatpush1.msra.mxu0 0.0
    %359 = vmatprep.subr.mxu0 0.0
    %360 = vmatpush1.msra.mxu0 0.0
    %361 = vmatprep.subr.mxu0 0.0
    %362 = vmatpush1.msra.mxu0 0.0
    %363 = vmatprep.subr.mxu0 0.0
    %364 = vmatpush1.msra.mxu0 0.0
    %365 = vmatprep.subr.mxu0 0.0
    %366 = vmatpush1.msra.mxu0 0.0
    %367 = vmatprep.subr.mxu0 0.0
    %368 = vmatpush1.msra.mxu0 0.0
    %369 = vmatprep.subr.mxu0 0.0
    %370 = vmatpush1.msra.mxu0 0.0
    %371 = vmatprep.subr.mxu0 0.0
    %372 = vmatpush1.msra.mxu0 0.0
    %373 = vmatprep.subr.mxu0 0.0
    %374 = vmatpush1.msra.mxu0 0.0
    %375 = vmatprep.subr.mxu0 0.0
    %376 = vmatpush1.msra.mxu0 0.0
    %377 = vmatprep.subr.mxu0 0.0
    %378 = vmatpush1.msra.mxu0 0.0
    %379 = vmatprep.subr.mxu0 0.0
    %380 = vmatpush1.msra.mxu0 0.0
    %381 = vmatprep.subr.mxu0 0.0
    %382 = vmatpush1.msra.mxu0 0.0
    %383 = vmatprep.subr.mxu0 0.0
    %384 = vmatpush1.msra.mxu0 0.0
    %385 = vmatprep.subr.mxu0 0.0
    %386 = vmatpush1.msra.mxu0 0.0
    %387 = vmatprep.subr.mxu0 0.0
    %388 = vmatpush1.msra.mxu0 0.0
    %389 = vmatprep.subr.mxu0 0.0
    %390 = vmatpush1.msra.mxu0 0.0
    %391 = vmatprep.mubr.f32.mxu0 0.0
    %392 = vmatmul.mubr.f32.gmra.mrb[0].mxu0 %v168
    %v393 = vpop.f32.mrb[0].mxu0
    %v394 = vadd.f32 0.0, %v393
    %v395 = vpop.f32.mrb[0].mxu0
    %v396 = vadd.f32 0.0, %v395
    %397 = vmatprep.mubr.f32.mxu0 0.0
    %398 = vmatmul.mubr.f32.gmra.mrb[0].mxu0 %v171
    %v399 = vpop.f32.mrb[0].mxu0
    %v400 = vadd.f32 0.0, %v399
    %v401 = vpop.f32.mrb[0].mxu0
    %v402 = vadd.f32 0.0, %v401
    %403 = vdwg.mxu0
    %404 = vmatprep.subr.mxu0 %v141
    %405 = vmatpush1.msra.mxu0 %v140
    %406 = vmatprep.subr.mxu0 %v149
    %407 = vmatpush1.msra.mxu0 %v148
    %408 = vmatprep.subr.mxu0 %v157
    %409 = vmatpush1.msra.mxu0 %v156
    %410 = vmatprep.subr.mxu0 %v165
    %411 = vmatpush1.msra.mxu0 %v164
    %412 = vmatprep.subr.mxu0 0.0
    %413 = vmatpush1.msra.mxu0 0.0
    %414 = vmatprep.subr.mxu0 0.0
    %415 = vmatpush1.msra.mxu0 0.0
    %416 = vmatprep.subr.mxu0 0.0
    %417 = vmatpush1.msra.mxu0 0.0
    %418 = vmatprep.subr.mxu0 0.0
    %419 = vmatpush1.msra.mxu0 0.0
    %420 = vmatprep.subr.mxu0 0.0
    %421 = vmatpush1.msra.mxu0 0.0
    %422 = vmatprep.subr.mxu0 0.0
    %423 = vmatpush1.msra.mxu0 0.0
    %424 = vmatprep.subr.mxu0 0.0
    %425 = vmatpush1.msra.mxu0 0.0
    %426 = vmatprep.subr.mxu0 0.0
    %427 = vmatpush1.msra.mxu0 0.0
    %428 = vmatprep.subr.mxu0 0.0
    %429 = vmatpush1.msra.mxu0 0.0
    %430 = vmatprep.subr.mxu0 0.0
    %431 = vmatpush1.msra.mxu0 0.0
    %432 = vmatprep.subr.mxu0 0.0
    %433 = vmatpush1.msra.mxu0 0.0
    %434 = vmatprep.subr.mxu0 0.0
    %435 = vmatpush1.msra.mxu0 0.0
    %436 = vmatprep.subr.mxu0 0.0
    %437 = vmatpush1.msra.mxu0 0.0
    %438 = vmatprep.subr.mxu0 0.0
    %439 = vmatpush1.msra.mxu0 0.0
    %440 = vmatprep.subr.mxu0 0.0
    %441 = vmatpush1.msra.mxu0 0.0
    %442 = vmatprep.subr.mxu0 0.0
    %443 = vmatpush1.msra.mxu0 0.0
    %444 = vmatprep.subr.mxu0 0.0
    %445 = vmatpush1.msra.mxu0 0.0
    %446 = vmatprep.subr.mxu0 0.0
    %447 = vmatpush1.msra.mxu0 0.0
    %448 = vmatprep.subr.mxu0 0.0
    %449 = vmatpush1.msra.mxu0 0.0
    %450 = vmatprep.subr.mxu0 0.0
    %451 = vmatpush1.msra.mxu0 0.0
    %452 = vmatprep.subr.mxu0 0.0
    %453 = vmatpush1.msra.mxu0 0.0
    %454 = vmatprep.subr.mxu0 0.0
    %455 = vmatpush1.msra.mxu0 0.0
    %456 = vmatprep.subr.mxu0 0.0
    %457 = vmatpush1.msra.mxu0 0.0
    %458 = vmatprep.subr.mxu0 0.0
    %459 = vmatpush1.msra.mxu0 0.0
    %460 = vmatprep.subr.mxu0 0.0
    %461 = vmatpush1.msra.mxu0 0.0
    %462 = vmatprep.subr.mxu0 0.0
    %463 = vmatpush1.msra.mxu0 0.0
    %464 = vmatprep.subr.mxu0 0.0
    %465 = vmatpush1.msra.mxu0 0.0
    %466 = vmatprep.subr.mxu0 0.0
    %467 = vmatpush1.msra.mxu0 0.0
    %468 = vmatprep.mubr.f32.mxu0 0.0
    %469 = vmatmul.mubr.f32.gmra.mrb[0].mxu0 %v168
    %v470 = vpop.f32.mrb[0].mxu0
    %v471 = vadd.f32 0.0, %v470
    %v472 = vpop.f32.mrb[0].mxu0
    %v473 = vadd.f32 0.0, %v472
    %474 = vmatprep.mubr.f32.mxu0 0.0
    %475 = vmatmul.mubr.f32.gmra.mrb[0].mxu0 %v171
    %v476 = vpop.f32.mrb[0].mxu0
    %v477 = vadd.f32 0.0, %v476
    %v478 = vpop.f32.mrb[0].mxu0
    %v479 = vadd.f32 0.0, %v478
    %480 = vdwg.mxu0
    %vm481 = vcmask 130048
    %v483 = vsel %vm481, %v114, 0
    %v486 = vsel %vm481, %v115, 0
    %488 = vmatprep.subr.mxu0 %v117
    %489 = vmatpush1.msra.mxu0 %v116
    %490 = vmatprep.subr.mxu0 %v125
    %491 = vmatpush1.msra.mxu0 %v124
    %492 = vmatprep.subr.mxu0 0.0
    %493 = vmatpush1.msra.mxu0 0.0
    %494 = vmatprep.subr.mxu0 0.0
    %495 = vmatpush1.msra.mxu0 0.0
    %496 = vmatprep.subr.mxu0 0.0
    %497 = vmatpush1.msra.mxu0 0.0
    %498 = vmatprep.subr.mxu0 0.0
    %499 = vmatpush1.msra.mxu0 0.0
    %500 = vmatprep.subr.mxu0 0.0
    %501 = vmatpush1.msra.mxu0 0.0
    %502 = vmatprep.subr.mxu0 0.0
    %503 = vmatpush1.msra.mxu0 0.0
    %504 = vmatprep.subr.mxu0 0.0
    %505 = vmatpush1.msra.mxu0 0.0
    %506 = vmatprep.subr.mxu0 0.0
    %507 = vmatpush1.msra.mxu0 0.0
    %508 = vmatprep.subr.mxu0 0.0
    %509 = vmatpush1.msra.mxu0 0.0
    %510 = vmatprep.subr.mxu0 0.0
    %511 = vmatpush1.msra.mxu0 0.0
    %512 = vmatprep.subr.mxu0 0.0
    %513 = vmatpush1.msra.mxu0 0.0
    %514 = vmatprep.subr.mxu0 0.0
    %515 = vmatpush1.msra.mxu0 0.0
    %516 = vmatprep.subr.mxu0 0.0
    %517 = vmatpush1.msra.mxu0 0.0
    %518 = vmatprep.subr.mxu0 0.0
    %519 = vmatpush1.msra.mxu0 0.0
    %520 = vmatprep.subr.mxu0 0.0
    %521 = vmatpush1.msra.mxu0 0.0
    %522 = vmatprep.subr.mxu0 0.0
    %523 = vmatpush1.msra.mxu0 0.0
    %524 = vmatprep.subr.mxu0 0.0
    %525 = vmatpush1.msra.mxu0 0.0
    %526 = vmatprep.subr.mxu0 0.0
    %527 = vmatpush1.msra.mxu0 0.0
    %528 = vmatprep.subr.mxu0 0.0
    %529 = vmatpush1.msra.mxu0 0.0
    %530 = vmatprep.subr.mxu0 0.0
    %531 = vmatpush1.msra.mxu0 0.0
    %532 = vmatprep.subr.mxu0 0.0
    %533 = vmatpush1.msra.mxu0 0.0
    %534 = vmatprep.subr.mxu0 0.0
    %535 = vmatpush1.msra.mxu0 0.0
    %536 = vmatprep.subr.mxu0 0.0
    %537 = vmatpush1.msra.mxu0 0.0
    %538 = vmatprep.subr.mxu0 0.0
    %539 = vmatpush1.msra.mxu0 0.0
    %540 = vmatprep.subr.mxu0 0.0
    %541 = vmatpush1.msra.mxu0 0.0
    %542 = vmatprep.subr.mxu0 0.0
    %543 = vmatpush1.msra.mxu0 0.0
    %544 = vmatprep.subr.mxu0 0.0
    %545 = vmatpush1.msra.mxu0 0.0
    %546 = vmatprep.subr.mxu0 0.0
    %547 = vmatpush1.msra.mxu0 0.0
    %548 = vmatprep.subr.mxu0 0.0
    %549 = vmatpush1.msra.mxu0 0.0
    %550 = vmatprep.subr.mxu0 0.0
    %551 = vmatpush1.msra.mxu0 0.0
    %552 = vmatprep.mubr.f32.mxu0 0.0
    %553 = vmatmul.mubr.f32.gmra.mrb[0].mxu0 %v483
    %v554 = vpop.f32.mrb[0].mxu0
    %v555 = vadd.f32 %v240, %v554
    %v556 = vpop.f32.mrb[0].mxu0
    %v557 = vadd.f32 %v242, %v556
    %558 = vmatprep.mubr.f32.mxu0 0.0
    %559 = vmatmul.mubr.f32.gmra.mrb[0].mxu0 %v486
    %v560 = vpop.f32.mrb[0].mxu0
    %v561 = vadd.f32 %v246, %v560
    %v562 = vpop.f32.mrb[0].mxu0
    %v563 = vadd.f32 %v248, %v562
    %564 = vdwg.mxu0
    %565 = vmatprep.subr.mxu0 %v119
    %566 = vmatpush1.msra.mxu0 %v118
    %567 = vmatprep.subr.mxu0 %v127
    %568 = vmatpush1.msra.mxu0 %v126
    %569 = vmatprep.subr.mxu0 0.0
    %570 = vmatpush1.msra.mxu0 0.0
    %571 = vmatprep.subr.mxu0 0.0
    %572 = vmatpush1.msra.mxu0 0.0
    %573 = vmatprep.subr.mxu0 0.0
    %574 = vmatpush1.msra.mxu0 0.0
    %575 = vmatprep.subr.mxu0 0.0
    %576 = vmatpush1.msra.mxu0 0.0
    %577 = vmatprep.subr.mxu0 0.0
    %578 = vmatpush1.msra.mxu0 0.0
    %579 = vmatprep.subr.mxu0 0.0
    %580 = vmatpush1.msra.mxu0 0.0
    %581 = vmatprep.subr.mxu0 0.0
    %582 = vmatpush1.msra.mxu0 0.0
    %583 = vmatprep.subr.mxu0 0.0
    %584 = vmatpush1.msra.mxu0 0.0
    %585 = vmatprep.subr.mxu0 0.0
    %586 = vmatpush1.msra.mxu0 0.0
    %587 = vmatprep.subr.mxu0 0.0
    %588 = vmatpush1.msra.mxu0 0.0
    %589 = vmatprep.subr.mxu0 0.0
    %590 = vmatpush1.msra.mxu0 0.0
    %591 = vmatprep.subr.mxu0 0.0
    %592 = vmatpush1.msra.mxu0 0.0
    %593 = vmatprep.subr.mxu0 0.0
    %594 = vmatpush1.msra.mxu0 0.0
    %595 = vmatprep.subr.mxu0 0.0
    %596 = vmatpush1.msra.mxu0 0.0
    %597 = vmatprep.subr.mxu0 0.0
    %598 = vmatpush1.msra.mxu0 0.0
    %599 = vmatprep.subr.mxu0 0.0
    %600 = vmatpush1.msra.mxu0 0.0
    %601 = vmatprep.subr.mxu0 0.0
    %602 = vmatpush1.msra.mxu0 0.0
    %603 = vmatprep.subr.mxu0 0.0
    %604 = vmatpush1.msra.mxu0 0.0
    %605 = vmatprep.subr.mxu0 0.0
    %606 = vmatpush1.msra.mxu0 0.0
    %607 = vmatprep.subr.mxu0 0.0
    %608 = vmatpush1.msra.mxu0 0.0
    %609 = vmatprep.subr.mxu0 0.0
    %610 = vmatpush1.msra.mxu0 0.0
    %611 = vmatprep.subr.mxu0 0.0
    %612 = vmatpush1.msra.mxu0 0.0
    %613 = vmatprep.subr.mxu0 0.0
    %614 = vmatpush1.msra.mxu0 0.0
    %615 = vmatprep.subr.mxu0 0.0
    %616 = vmatpush1.msra.mxu0 0.0
    %617 = vmatprep.subr.mxu0 0.0
    %618 = vmatpush1.msra.mxu0 0.0
    %619 = vmatprep.subr.mxu0 0.0
    %620 = vmatpush1.msra.mxu0 0.0
    %621 = vmatprep.subr.mxu0 0.0
    %622 = vmatpush1.msra.mxu0 0.0
    %623 = vmatprep.subr.mxu0 0.0
    %624 = vmatpush1.msra.mxu0 0.0
    %625 = vmatprep.subr.mxu0 0.0
    %626 = vmatpush1.msra.mxu0 0.0
    %627 = vmatprep.subr.mxu0 0.0
    %628 = vmatpush1.msra.mxu0 0.0
    %629 = vmatprep.mubr.f32.mxu0 0.0
    %630 = vmatmul.mubr.f32.gmra.mrb[0].mxu0 %v483
    %v631 = vpop.f32.mrb[0].mxu0
    %v632 = vadd.f32 %v317, %v631
    %v633 = vpop.f32.mrb[0].mxu0
    %v634 = vadd.f32 %v319, %v633
    %635 = vmatprep.mubr.f32.mxu0 0.0
    %636 = vmatmul.mubr.f32.gmra.mrb[0].mxu0 %v486
    %v637 = vpop.f32.mrb[0].mxu0
    %v638 = vadd.f32 %v323, %v637
    %v639 = vpop.f32.mrb[0].mxu0
    %v640 = vadd.f32 %v325, %v639
    %641 = vdwg.mxu0
    %642 = vmatprep.subr.mxu0 %v121
    %643 = vmatpush1.msra.mxu0 %v120
    %644 = vmatprep.subr.mxu0 %v129
    %645 = vmatpush1.msra.mxu0 %v128
    %646 = vmatprep.subr.mxu0 0.0
    %647 = vmatpush1.msra.mxu0 0.0
    %648 = vmatprep.subr.mxu0 0.0
    %649 = vmatpush1.msra.mxu0 0.0
    %650 = vmatprep.subr.mxu0 0.0
    %651 = vmatpush1.msra.mxu0 0.0
    %652 = vmatprep.subr.mxu0 0.0
    %653 = vmatpush1.msra.mxu0 0.0
    %654 = vmatprep.subr.mxu0 0.0
    %655 = vmatpush1.msra.mxu0 0.0
    %656 = vmatprep.subr.mxu0 0.0
    %657 = vmatpush1.msra.mxu0 0.0
    %658 = vmatprep.subr.mxu0 0.0
    %659 = vmatpush1.msra.mxu0 0.0
    %660 = vmatprep.subr.mxu0 0.0
    %661 = vmatpush1.msra.mxu0 0.0
    %662 = vmatprep.subr.mxu0 0.0
    %663 = vmatpush1.msra.mxu0 0.0
    %664 = vmatprep.subr.mxu0 0.0
    %665 = vmatpush1.msra.mxu0 0.0
    %666 = vmatprep.subr.mxu0 0.0
    %667 = vmatpush1.msra.mxu0 0.0
    %668 = vmatprep.subr.mxu0 0.0
    %669 = vmatpush1.msra.mxu0 0.0
    %670 = vmatprep.subr.mxu0 0.0
    %671 = vmatpush1.msra.mxu0 0.0
    %672 = vmatprep.subr.mxu0 0.0
    %673 = vmatpush1.msra.mxu0 0.0
    %674 = vmatprep.subr.mxu0 0.0
    %675 = vmatpush1.msra.mxu0 0.0
    %676 = vmatprep.subr.mxu0 0.0
    %677 = vmatpush1.msra.mxu0 0.0
    %678 = vmatprep.subr.mxu0 0.0
    %679 = vmatpush1.msra.mxu0 0.0
    %680 = vmatprep.subr.mxu0 0.0
    %681 = vmatpush1.msra.mxu0 0.0
    %682 = vmatprep.subr.mxu0 0.0
    %683 = vmatpush1.msra.mxu0 0.0
    %684 = vmatprep.subr.mxu0 0.0
    %685 = vmatpush1.msra.mxu0 0.0
    %686 = vmatprep.subr.mxu0 0.0
    %687 = vmatpush1.msra.mxu0 0.0
    %688 = vmatprep.subr.mxu0 0.0
    %689 = vmatpush1.msra.mxu0 0.0
    %690 = vmatprep.subr.mxu0 0.0
    %691 = vmatpush1.msra.mxu0 0.0
    %692 = vmatprep.subr.mxu0 0.0
    %693 = vmatpush1.msra.mxu0 0.0
    %694 = vmatprep.subr.mxu0 0.0
    %695 = vmatpush1.msra.mxu0 0.0
    %696 = vmatprep.subr.mxu0 0.0
    %697 = vmatpush1.msra.mxu0 0.0
    %698 = vmatprep.subr.mxu0 0.0
    %699 = vmatpush1.msra.mxu0 0.0
    %700 = vmatprep.subr.mxu0 0.0
    %701 = vmatpush1.msra.mxu0 0.0
    %702 = vmatprep.subr.mxu0 0.0
    %703 = vmatpush1.msra.mxu0 0.0
    %704 = vmatprep.subr.mxu0 0.0
    %705 = vmatpush1.msra.mxu0 0.0
    %706 = vmatprep.mubr.f32.mxu0 0.0
    %707 = vmatmul.mubr.f32.gmra.mrb[0].mxu0 %v483
    %v708 = vpop.f32.mrb[0].mxu0
    %v709 = vadd.f32 %v394, %v708
    %v710 = vpop.f32.mrb[0].mxu0
    %v711 = vadd.f32 %v396, %v710
    %712 = vmatprep.mubr.f32.mxu0 0.0
    %713 = vmatmul.mubr.f32.gmra.mrb[0].mxu0 %v486
    %v714 = vpop.f32.mrb[0].mxu0
    %v715 = vadd.f32 %v400, %v714
    %v716 = vpop.f32.mrb[0].mxu0
    %v717 = vadd.f32 %v402, %v716
    %718 = vdwg.mxu0
    %719 = vmatprep.subr.mxu0 %v123
    %720 = vmatpush1.msra.mxu0 %v122
    %721 = vmatprep.subr.mxu0 %v131
    %722 = vmatpush1.msra.mxu0 %v130
    %723 = vmatprep.subr.mxu0 0.0
    %724 = vmatpush1.msra.mxu0 0.0
    %725 = vmatprep.subr.mxu0 0.0
    %726 = vmatpush1.msra.mxu0 0.0
    %727 = vmatprep.subr.mxu0 0.0
    %728 = vmatpush1.msra.mxu0 0.0
    %729 = vmatprep.subr.mxu0 0.0
    %730 = vmatpush1.msra.mxu0 0.0
    %731 = vmatprep.subr.mxu0 0.0
    %732 = vmatpush1.msra.mxu0 0.0
    %733 = vmatprep.subr.mxu0 0.0
    %734 = vmatpush1.msra.mxu0 0.0
    %735 = vmatprep.subr.mxu0 0.0
    %736 = vmatpush1.msra.mxu0 0.0
    %737 = vmatprep.subr.mxu0 0.0
    %738 = vmatpush1.msra.mxu0 0.0
    %739 = vmatprep.subr.mxu0 0.0
    %740 = vmatpush1.msra.mxu0 0.0
    %741 = vmatprep.subr.mxu0 0.0
    %742 = vmatpush1.msra.mxu0 0.0
    %743 = vmatprep.subr.mxu0 0.0
    %744 = vmatpush1.msra.mxu0 0.0
    %745 = vmatprep.subr.mxu0 0.0
    %746 = vmatpush1.msra.mxu0 0.0
    %747 = vmatprep.subr.mxu0 0.0
    %748 = vmatpush1.msra.mxu0 0.0
    %749 = vmatprep.subr.mxu0 0.0
    %750 = vmatpush1.msra.mxu0 0.0
    %751 = vmatprep.subr.mxu0 0.0
    %752 = vmatpush1.msra.mxu0 0.0
    %753 = vmatprep.subr.mxu0 0.0
    %754 = vmatpush1.msra.mxu0 0.0
    %755 = vmatprep.subr.mxu0 0.0
    %756 = vmatpush1.msra.mxu0 0.0
    %757 = vmatprep.subr.mxu0 0.0
    %758 = vmatpush1.msra.mxu0 0.0
    %759 = vmatprep.subr.mxu0 0.0
    %760 = vmatpush1.msra.mxu0 0.0
    %761 = vmatprep.subr.mxu0 0.0
    %762 = vmatpush1.msra.mxu0 0.0
    %763 = vmatprep.subr.mxu0 0.0
    %764 = vmatpush1.msra.mxu0 0.0
    %765 = vmatprep.subr.mxu0 0.0
    %766 = vmatpush1.msra.mxu0 0.0
    %767 = vmatprep.subr.mxu0 0.0
    %768 = vmatpush1.msra.mxu0 0.0
    %769 = vmatprep.subr.mxu0 0.0
    %770 = vmatpush1.msra.mxu0 0.0
    %771 = vmatprep.subr.mxu0 0.0
    %772 = vmatpush1.msra.mxu0 0.0
    %773 = vmatprep.subr.mxu0 0.0
    %774 = vmatpush1.msra.mxu0 0.0
    %775 = vmatprep.subr.mxu0 0.0
    %776 = vmatpush1.msra.mxu0 0.0
    %777 = vmatprep.subr.mxu0 0.0
    %778 = vmatpush1.msra.mxu0 0.0
    %779 = vmatprep.subr.mxu0 0.0
    %780 = vmatpush1.msra.mxu0 0.0
    %781 = vmatprep.subr.mxu0 0.0
    %782 = vmatpush1.msra.mxu0 0.0
    %783 = vmatprep.mubr.f32.mxu0 0.0
    %784 = vmatmul.mubr.f32.gmra.mrb[0].mxu0 %v483
    %v785 = vpop.f32.mrb[0].mxu0
    %v786 = vadd.f32 %v471, %v785
    %v787 = vpop.f32.mrb[0].mxu0
    %v788 = vadd.f32 %v473, %v787
    %789 = vmatprep.mubr.f32.mxu0 0.0
    %790 = vmatmul.mubr.f32.gmra.mrb[0].mxu0 %v486
    %v791 = vpop.f32.mrb[0].mxu0
    %v792 = vadd.f32 %v477, %v791
    %v793 = vpop.f32.mrb[0].mxu0
    %v794 = vadd.f32 %v479, %v793
    %795 = vdwg.mxu0
    %v796 = vld [vmem:[%s5] sm:$0xff]
    %v798 = vlaneseq
    %v799 = vshrl.u32 %v798, 7
    %v800 = vsub.s32 0, %v799
    %v801 = vrot.slane %v796, %v800
    %v802 = vlaneseq
    %v803 = vshrl.u32 %v802, 7
    %v804 = vsub.s32 1, %v803
    %v805 = vrot.slane %v796, %v804
    %v806 = vlaneseq
    %v807 = vshrl.u32 %v806, 7
    %v808 = vsub.s32 2, %v807
    %v809 = vrot.slane %v796, %v808
    %v810 = vlaneseq
    %v811 = vshrl.u32 %v810, 7
    %v812 = vsub.s32 3, %v811
    %v813 = vrot.slane %v796, %v812
    %v814 = vlaneseq
    %v815 = vshrl.u32 %v814, 7
    %v816 = vsub.s32 4, %v815
    %v817 = vrot.slane %v796, %v816
    %v818 = vlaneseq
    %v819 = vshrl.u32 %v818, 7
    %v820 = vsub.s32 5, %v819
    %v821 = vrot.slane %v796, %v820
    %v822 = vlaneseq
    %v823 = vshrl.u32 %v822, 7
    %v824 = vsub.s32 6, %v823
    %v825 = vrot.slane %v796, %v824
    %v826 = vlaneseq
    %v827 = vshrl.u32 %v826, 7
    %v828 = vsub.s32 7, %v827
    %v829 = vrot.slane %v796, %v828
    %v838 = vadd.f32 %v555, %v801
    %v839 = vadd.f32 %v557, %v805
    %v840 = vadd.f32 %v632, %v809
    %v841 = vadd.f32 %v634, %v813
    %v842 = vadd.f32 %v709, %v817
    %v843 = vadd.f32 %v711, %v821
    %v844 = vadd.f32 %v786, %v825
    %v845 = vadd.f32 %v788, %v829
    %v846 = vadd.f32 %v561, %v801
    %v847 = vadd.f32 %v563, %v805
    %v848 = vadd.f32 %v638, %v809
    %v849 = vadd.f32 %v640, %v813
    %v850 = vadd.f32 %v715, %v817
    %v851 = vadd.f32 %v717, %v821
    %v852 = vadd.f32 %v792, %v825
    %v853 = vadd.f32 %v794, %v829
    %v854 = vld [vmem:[#allocation6] sm:$0xff]
    %v855 = vld [vmem:[#allocation6 + $0x8] sm:$0xff]
    %v856 = vld [vmem:[#allocation6 + $0x10] sm:$0xff]
    %v857 = vld [vmem:[#allocation6 + $0x18] sm:$0xff]
    %v858 = vld [vmem:[#allocation6 + $0x20] sm:$0xff]
    %v859 = vld [vmem:[#allocation6 + $0x28] sm:$0xff]
    %v860 = vld [vmem:[#allocation6 + $0x30] sm:$0xff]
    %v861 = vld [vmem:[#allocation6 + $0x38] sm:$0xff]
    %v862 = vld [vmem:[#allocation6 + $0x40] sm:$0xff]
    %v863 = vld [vmem:[#allocation6 + $0x48] sm:$0xff]
    %v864 = vld [vmem:[#allocation6 + $0x50] sm:$0xff]
    %v865 = vld [vmem:[#allocation6 + $0x58] sm:$0xff]
    %v866 = vld [vmem:[#allocation6 + $0x60] sm:$0xff]
    %v867 = vld [vmem:[#allocation6 + $0x68] sm:$0xff]
    %v868 = vld [vmem:[#allocation6 + $0x70] sm:$0xff]
    %v869 = vld [vmem:[#allocation6 + $0x78] sm:$0xff]
    %v870 = vmul.f32 %v838, %v854
    %v871 = vmul.f32 %v839, %v855
    %v872 = vmul.f32 %v840, %v856
    %v873 = vmul.f32 %v841, %v857
    %v874 = vmul.f32 %v842, %v858
    %v875 = vmul.f32 %v843, %v859
    %v876 = vmul.f32 %v844, %v860
    %v877 = vmul.f32 %v845, %v861
    %v878 = vmul.f32 %v846, %v862
    %v879 = vmul.f32 %v847, %v863
    %v880 = vmul.f32 %v848, %v864
    %v881 = vmul.f32 %v849, %v865
    %v882 = vmul.f32 %v850, %v866
    %v883 = vmul.f32 %v851, %v867
    %v884 = vmul.f32 %v852, %v868
    %v885 = vmul.f32 %v853, %v869
    %vm886 = vcmp.ge.f32.partialorder %v870, 0.0
    %vm887 = vcmp.ge.f32.partialorder %v871, 0.0
    %vm888 = vcmp.ge.f32.partialorder %v872, 0.0
    %vm889 = vcmp.ge.f32.partialorder %v873, 0.0
    %vm890 = vcmp.ge.f32.partialorder %v874, 0.0
    %vm891 = vcmp.ge.f32.partialorder %v875, 0.0
    %vm892 = vcmp.ge.f32.partialorder %v876, 0.0
    %vm893 = vcmp.ge.f32.partialorder %v877, 0.0
    %vm894 = vcmp.ge.f32.partialorder %v878, 0.0
    %vm895 = vcmp.ge.f32.partialorder %v879, 0.0
    %vm896 = vcmp.ge.f32.partialorder %v880, 0.0
    %vm897 = vcmp.ge.f32.partialorder %v881, 0.0
    %vm898 = vcmp.ge.f32.partialorder %v882, 0.0
    %vm899 = vcmp.ge.f32.partialorder %v883, 0.0
    %vm900 = vcmp.ge.f32.partialorder %v884, 0.0
    %vm901 = vcmp.ge.f32.partialorder %v885, 0.0
    %v902 = vmul.f32 %v870, 0.01
    %v903 = vmul.f32 %v871, 0.01
    %v904 = vmul.f32 %v872, 0.01
    %v905 = vmul.f32 %v873, 0.01
    %v906 = vmul.f32 %v874, 0.01
    %v907 = vmul.f32 %v875, 0.01
    %v908 = vmul.f32 %v876, 0.01
    %v909 = vmul.f32 %v877, 0.01
    %v910 = vmul.f32 %v878, 0.01
    %v911 = vmul.f32 %v879, 0.01
    %v912 = vmul.f32 %v880, 0.01
    %v913 = vmul.f32 %v881, 0.01
    %v914 = vmul.f32 %v882, 0.01
    %v915 = vmul.f32 %v883, 0.01
    %v916 = vmul.f32 %v884, 0.01
    %v917 = vmul.f32 %v885, 0.01
    %v918 = vsel %vm886, %v870, %v902
    %v919 = vsel %vm887, %v871, %v903
    %v920 = vsel %vm888, %v872, %v904
    %v921 = vsel %vm889, %v873, %v905
    %v922 = vsel %vm890, %v874, %v906
    %v923 = vsel %vm891, %v875, %v907
    %v924 = vsel %vm892, %v876, %v908
    %v925 = vsel %vm893, %v877, %v909
    %v926 = vsel %vm894, %v878, %v910
    %v927 = vsel %vm895, %v879, %v911
    %v928 = vsel %vm896, %v880, %v912
    %v929 = vsel %vm897, %v881, %v913
    %v930 = vsel %vm898, %v882, %v914
    %v931 = vsel %vm899, %v883, %v915
    %v932 = vsel %vm900, %v884, %v916
    %v933 = vsel %vm901, %v885, %v917
    %v934 = vld [vmem:[#allocation10] sm:$0xff]
    %v935 = vld [vmem:[#allocation10 + $0x8] sm:$0xff]
    %v936 = vld [vmem:[#allocation10 + $0x10] sm:$0xff]
    %v937 = vld [vmem:[#allocation10 + $0x18] sm:$0xff]
    %v938 = vld [vmem:[#allocation10 + $0x20] sm:$0xff]
    %v939 = vld [vmem:[#allocation10 + $0x28] sm:$0xff]
    %v940 = vld [vmem:[#allocation10 + $0x30] sm:$0xff]
    %v941 = vld [vmem:[#allocation10 + $0x38] sm:$0xff]
    %v942 = vld [vmem:[#allocation10 + $0x40] sm:$0xff]
    %v943 = vld [vmem:[#allocation10 + $0x48] sm:$0xff]
    %v944 = vld [vmem:[#allocation10 + $0x50] sm:$0xff]
    %v945 = vld [vmem:[#allocation10 + $0x58] sm:$0xff]
    %v946 = vld [vmem:[#allocation10 + $0x60] sm:$0xff]
    %v947 = vld [vmem:[#allocation10 + $0x68] sm:$0xff]
    %v948 = vld [vmem:[#allocation10 + $0x70] sm:$0xff]
    %v949 = vld [vmem:[#allocation10 + $0x78] sm:$0xff]
    %v950 = vld [vmem:[#allocation10 + $0x80] sm:$0xff]
    %v951 = vld [vmem:[#allocation10 + $0x88] sm:$0xff]
    %v952 = vld [vmem:[#allocation10 + $0x90] sm:$0xff]
    %v953 = vld [vmem:[#allocation10 + $0x98] sm:$0xff]
    %v954 = vld [vmem:[#allocation10 + $0xa0] sm:$0xff]
    %v955 = vld [vmem:[#allocation10 + $0xa8] sm:$0xff]
    %v956 = vld [vmem:[#allocation10 + $0xb0] sm:$0xff]
    %v957 = vld [vmem:[#allocation10 + $0xb8] sm:$0xff]
    %v958 = vld [vmem:[#allocation10 + $0xc0] sm:$0xff]
    %v959 = vld [vmem:[#allocation10 + $0xc8] sm:$0xff]
    %v960 = vld [vmem:[#allocation10 + $0xd0] sm:$0xff]
    %v961 = vld [vmem:[#allocation10 + $0xd8] sm:$0xff]
    %v962 = vld [vmem:[#allocation10 + $0xe0] sm:$0xff]
    %v963 = vld [vmem:[#allocation10 + $0xe8] sm:$0xff]
    %v964 = vld [vmem:[#allocation10 + $0xf0] sm:$0xff]
    %v965 = vld [vmem:[#allocation10 + $0xf8] sm:$0xff]
    %v966 = vld [vmem:[#allocation10 + $0x100] sm:$0xff]
    %v967 = vld [vmem:[#allocation10 + $0x108] sm:$0xff]
    %v968 = vld [vmem:[#allocation10 + $0x110] sm:$0xff]
    %v969 = vld [vmem:[#allocation10 + $0x118] sm:$0xff]
    %v970 = vld [vmem:[#allocation10 + $0x120] sm:$0xff]
    %v971 = vld [vmem:[#allocation10 + $0x128] sm:$0xff]
    %v972 = vld [vmem:[#allocation10 + $0x130] sm:$0xff]
    %v973 = vld [vmem:[#allocation10 + $0x138] sm:$0xff]
    %v974 = vld [vmem:[#allocation10 + $0x140] sm:$0xff]
    %v975 = vld [vmem:[#allocation10 + $0x148] sm:$0xff]
    %v976 = vld [vmem:[#allocation10 + $0x150] sm:$0xff]
    %v977 = vld [vmem:[#allocation10 + $0x158] sm:$0xff]
    %v978 = vld [vmem:[#allocation10 + $0x160] sm:$0xff]
    %v979 = vld [vmem:[#allocation10 + $0x168] sm:$0xff]
    %v980 = vld [vmem:[#allocation10 + $0x170] sm:$0xff]
    %v981 = vld [vmem:[#allocation10 + $0x178] sm:$0xff]
    %v982 = vld [vmem:[#allocation10 + $0x180] sm:$0xff]
    %v983 = vld [vmem:[#allocation10 + $0x188] sm:$0xff]
    %v984 = vld [vmem:[#allocation10 + $0x190] sm:$0xff]
    %v985 = vld [vmem:[#allocation10 + $0x198] sm:$0xff]
    %v986 = vld [vmem:[#allocation10 + $0x1a0] sm:$0xff]
    %v987 = vld [vmem:[#allocation10 + $0x1a8] sm:$0xff]
    %v988 = vld [vmem:[#allocation10 + $0x1b0] sm:$0xff]
    %v989 = vld [vmem:[#allocation10 + $0x1b8] sm:$0xff]
    %v990 = vld [vmem:[#allocation10 + $0x1c0] sm:$0xff]
    %v991 = vld [vmem:[#allocation10 + $0x1c8] sm:$0xff]
    %v992 = vld [vmem:[#allocation10 + $0x1d0] sm:$0xff]
    %v993 = vld [vmem:[#allocation10 + $0x1d8] sm:$0xff]
    %v994 = vld [vmem:[#allocation10 + $0x1e0] sm:$0xff]
    %v995 = vld [vmem:[#allocation10 + $0x1e8] sm:$0xff]
    %v996 = vld [vmem:[#allocation10 + $0x1f0] sm:$0xff]
    %v997 = vld [vmem:[#allocation10 + $0x1f8] sm:$0xff]
    %v998 = vld [vmem:[#allocation10 + $0x200] sm:$0xff]
    %v999 = vld [vmem:[#allocation10 + $0x208] sm:$0xff]
    %v1000 = vld [vmem:[#allocation10 + $0x210] sm:$0xff]
    %v1001 = vld [vmem:[#allocation10 + $0x218] sm:$0xff]
    %v1002 = vld [vmem:[#allocation10 + $0x220] sm:$0xff]
    %v1003 = vld [vmem:[#allocation10 + $0x228] sm:$0xff]
    %v1004 = vld [vmem:[#allocation10 + $0x230] sm:$0xff]
    %v1005 = vld [vmem:[#allocation10 + $0x238] sm:$0xff]
    %v1006 = vld [vmem:[#allocation10 + $0x240] sm:$0xff]
    %v1007 = vld [vmem:[#allocation10 + $0x248] sm:$0xff]
    %v1008 = vld [vmem:[#allocation10 + $0x250] sm:$0xff]
    %v1009 = vld [vmem:[#allocation10 + $0x258] sm:$0xff]
    %v1010 = vld [vmem:[#allocation10 + $0x260] sm:$0xff]
    %v1011 = vld [vmem:[#allocation10 + $0x268] sm:$0xff]
    %v1012 = vld [vmem:[#allocation10 + $0x270] sm:$0xff]
    %v1013 = vld [vmem:[#allocation10 + $0x278] sm:$0xff]
    %v1014 = vld [vmem:[#allocation10 + $0x280] sm:$0xff]
    %v1015 = vld [vmem:[#allocation10 + $0x288] sm:$0xff]
    %v1016 = vld [vmem:[#allocation10 + $0x290] sm:$0xff]
    %v1017 = vld [vmem:[#allocation10 + $0x298] sm:$0xff]
    %v1018 = vld [vmem:[#allocation10 + $0x2a0] sm:$0xff]
    %v1019 = vld [vmem:[#allocation10 + $0x2a8] sm:$0xff]
    %v1020 = vld [vmem:[#allocation10 + $0x2b0] sm:$0xff]
    %v1021 = vld [vmem:[#allocation10 + $0x2b8] sm:$0xff]
    %v1022 = vld [vmem:[#allocation10 + $0x2c0] sm:$0xff]
    %v1023 = vld [vmem:[#allocation10 + $0x2c8] sm:$0xff]
    %v1024 = vld [vmem:[#allocation10 + $0x2d0] sm:$0xff]
    %v1025 = vld [vmem:[#allocation10 + $0x2d8] sm:$0xff]
    %v1026 = vld [vmem:[#allocation10 + $0x2e0] sm:$0xff]
    %v1027 = vld [vmem:[#allocation10 + $0x2e8] sm:$0xff]
    %v1028 = vld [vmem:[#allocation10 + $0x2f0] sm:$0xff]
    %v1029 = vld [vmem:[#allocation10 + $0x2f8] sm:$0xff]
    %v1030 = vld [vmem:[#allocation10 + $0x300] sm:$0xff]
    %v1031 = vld [vmem:[#allocation10 + $0x308] sm:$0xff]
    %v1032 = vld [vmem:[#allocation10 + $0x310] sm:$0xff]
    %v1033 = vld [vmem:[#allocation10 + $0x318] sm:$0xff]
    %v1034 = vld [vmem:[#allocation10 + $0x320] sm:$0xff]
    %v1035 = vld [vmem:[#allocation10 + $0x328] sm:$0xff]
    %v1036 = vld [vmem:[#allocation10 + $0x330] sm:$0xff]
    %v1037 = vld [vmem:[#allocation10 + $0x338] sm:$0xff]
    %v1038 = vld [vmem:[#allocation10 + $0x340] sm:$0xff]
    %v1039 = vld [vmem:[#allocation10 + $0x348] sm:$0xff]
    %v1040 = vld [vmem:[#allocation10 + $0x350] sm:$0xff]
    %v1041 = vld [vmem:[#allocation10 + $0x358] sm:$0xff]
    %v1042 = vld [vmem:[#allocation10 + $0x360] sm:$0xff]
    %v1043 = vld [vmem:[#allocation10 + $0x368] sm:$0xff]
    %v1044 = vld [vmem:[#allocation10 + $0x370] sm:$0xff]
    %v1045 = vld [vmem:[#allocation10 + $0x378] sm:$0xff]
    %v1046 = vld [vmem:[#allocation10 + $0x380] sm:$0xff]
    %v1047 = vld [vmem:[#allocation10 + $0x388] sm:$0xff]
    %v1048 = vld [vmem:[#allocation10 + $0x390] sm:$0xff]
    %v1049 = vld [vmem:[#allocation10 + $0x398] sm:$0xff]
    %v1050 = vld [vmem:[#allocation10 + $0x3a0] sm:$0xff]
    %v1051 = vld [vmem:[#allocation10 + $0x3a8] sm:$0xff]
    %v1052 = vld [vmem:[#allocation10 + $0x3b0] sm:$0xff]
    %v1053 = vld [vmem:[#allocation10 + $0x3b8] sm:$0xff]
    %v1054 = vld [vmem:[#allocation10 + $0x3c0] sm:$0xff]
    %v1055 = vld [vmem:[#allocation10 + $0x3c8] sm:$0xff]
    %v1056 = vld [vmem:[#allocation10 + $0x3d0] sm:$0xff]
    %v1057 = vld [vmem:[#allocation10 + $0x3d8] sm:$0xff]
    %v1058 = vld [vmem:[#allocation10 + $0x3e0] sm:$0xff]
    %v1059 = vld [vmem:[#allocation10 + $0x3e8] sm:$0xff]
    %v1060 = vld [vmem:[#allocation10 + $0x3f0] sm:$0xff]
    %v1061 = vld [vmem:[#allocation10 + $0x3f8] sm:$0xff]
    %v1062 = vld [vmem:[%s7] sm:$0x1]
    %v1064 = vlaneseq
    %v1065 = vshrl.u32 %v1064, 7
    %v1066 = vsub.s32 0, %v1065
    %v1067 = vrot.slane %v1062, %v1066
    %1069 = vmatprep.subr.mxu0 0.0
    %1070 = vmatpush1.msra.mxu0 %v934
    %1071 = vmatprep.subr.mxu0 0.0
    %1072 = vmatpush1.msra.mxu0 %v935
    %1073 = vmatprep.subr.mxu0 0.0
    %1074 = vmatpush1.msra.mxu0 %v936
    %1075 = vmatprep.subr.mxu0 0.0
    %1076 = vmatpush1.msra.mxu0 %v937
    %1077 = vmatprep.subr.mxu0 0.0
    %1078 = vmatpush1.msra.mxu0 %v938
    %1079 = vmatprep.subr.mxu0 0.0
    %1080 = vmatpush1.msra.mxu0 %v939
    %1081 = vmatprep.subr.mxu0 0.0
    %1082 = vmatpush1.msra.mxu0 %v940
    %1083 = vmatprep.subr.mxu0 0.0
    %1084 = vmatpush1.msra.mxu0 %v941
    %1085 = vmatprep.subr.mxu0 0.0
    %1086 = vmatpush1.msra.mxu0 %v942
    %1087 = vmatprep.subr.mxu0 0.0
    %1088 = vmatpush1.msra.mxu0 %v943
    %1089 = vmatprep.subr.mxu0 0.0
    %1090 = vmatpush1.msra.mxu0 %v944
    %1091 = vmatprep.subr.mxu0 0.0
    %1092 = vmatpush1.msra.mxu0 %v945
    %1093 = vmatprep.subr.mxu0 0.0
    %1094 = vmatpush1.msra.mxu0 %v946
    %1095 = vmatprep.subr.mxu0 0.0
    %1096 = vmatpush1.msra.mxu0 %v947
    %1097 = vmatprep.subr.mxu0 0.0
    %1098 = vmatpush1.msra.mxu0 %v948
    %1099 = vmatprep.subr.mxu0 0.0
    %1100 = vmatpush1.msra.mxu0 %v949
    %1101 = vmatprep.subr.mxu0 0.0
    %1102 = vmatpush1.msra.mxu0 %v950
    %1103 = vmatprep.subr.mxu0 0.0
    %1104 = vmatpush1.msra.mxu0 %v951
    %1105 = vmatprep.subr.mxu0 0.0
    %1106 = vmatpush1.msra.mxu0 %v952
    %1107 = vmatprep.subr.mxu0 0.0
    %1108 = vmatpush1.msra.mxu0 %v953
    %1109 = vmatprep.subr.mxu0 0.0
    %1110 = vmatpush1.msra.mxu0 %v954
    %1111 = vmatprep.subr.mxu0 0.0
    %1112 = vmatpush1.msra.mxu0 %v955
    %1113 = vmatprep.subr.mxu0 0.0
    %1114 = vmatpush1.msra.mxu0 %v956
    %1115 = vmatprep.subr.mxu0 0.0
    %1116 = vmatpush1.msra.mxu0 %v957
    %1117 = vmatprep.subr.mxu0 0.0
    %1118 = vmatpush1.msra.mxu0 %v958
    %1119 = vmatprep.subr.mxu0 0.0
    %1120 = vmatpush1.msra.mxu0 %v959
    %1121 = vmatprep.subr.mxu0 0.0
    %1122 = vmatpush1.msra.mxu0 %v960
    %1123 = vmatprep.subr.mxu0 0.0
    %1124 = vmatpush1.msra.mxu0 %v961
    %1125 = vmatprep.subr.mxu0 0.0
    %1126 = vmatpush1.msra.mxu0 %v962
    %1127 = vmatprep.subr.mxu0 0.0
    %1128 = vmatpush1.msra.mxu0 %v963
    %1129 = vmatprep.subr.mxu0 0.0
    %1130 = vmatpush1.msra.mxu0 %v964
    %1131 = vmatprep.subr.mxu0 0.0
    %1132 = vmatpush1.msra.mxu0 %v965
    %1133 = vmatprep.mubr.f32.mxu0 %v919
    %1134 = vmatmul.mubr.f32.gmra.mrb[0].mxu0 %v918
    %v1135 = vpop.f32.mrb[0].mxu0
    %v1136 = vadd.f32 %v1067, %v1135
    %v1137 = vpop.f32.mrb[0].mxu0
    %1138 = vmatprep.mubr.f32.mxu0 %v927
    %1139 = vmatmul.mubr.f32.gmra.mrb[0].mxu0 %v926
    %v1140 = vpop.f32.mrb[0].mxu0
    %v1141 = vadd.f32 %v1067, %v1140
    %v1142 = vpop.f32.mrb[0].mxu0
    %1143 = vdwg.mxu0
    %1144 = vmatprep.subr.mxu0 0.0
    %1145 = vmatpush1.msra.mxu0 %v966
    %1146 = vmatprep.subr.mxu0 0.0
    %1147 = vmatpush1.msra.mxu0 %v967
    %1148 = vmatprep.subr.mxu0 0.0
    %1149 = vmatpush1.msra.mxu0 %v968
    %1150 = vmatprep.subr.mxu0 0.0
    %1151 = vmatpush1.msra.mxu0 %v969
    %1152 = vmatprep.subr.mxu0 0.0
    %1153 = vmatpush1.msra.mxu0 %v970
    %1154 = vmatprep.subr.mxu0 0.0
    %1155 = vmatpush1.msra.mxu0 %v971
    %1156 = vmatprep.subr.mxu0 0.0
    %1157 = vmatpush1.msra.mxu0 %v972
    %1158 = vmatprep.subr.mxu0 0.0
    %1159 = vmatpush1.msra.mxu0 %v973
    %1160 = vmatprep.subr.mxu0 0.0
    %1161 = vmatpush1.msra.mxu0 %v974
    %1162 = vmatprep.subr.mxu0 0.0
    %1163 = vmatpush1.msra.mxu0 %v975
    %1164 = vmatprep.subr.mxu0 0.0
    %1165 = vmatpush1.msra.mxu0 %v976
    %1166 = vmatprep.subr.mxu0 0.0
    %1167 = vmatpush1.msra.mxu0 %v977
    %1168 = vmatprep.subr.mxu0 0.0
    %1169 = vmatpush1.msra.mxu0 %v978
    %1170 = vmatprep.subr.mxu0 0.0
    %1171 = vmatpush1.msra.mxu0 %v979
    %1172 = vmatprep.subr.mxu0 0.0
    %1173 = vmatpush1.msra.mxu0 %v980
    %1174 = vmatprep.subr.mxu0 0.0
    %1175 = vmatpush1.msra.mxu0 %v981
    %1176 = vmatprep.subr.mxu0 0.0
    %1177 = vmatpush1.msra.mxu0 %v982
    %1178 = vmatprep.subr.mxu0 0.0
    %1179 = vmatpush1.msra.mxu0 %v983
    %1180 = vmatprep.subr.mxu0 0.0
    %1181 = vmatpush1.msra.mxu0 %v984
    %1182 = vmatprep.subr.mxu0 0.0
    %1183 = vmatpush1.msra.mxu0 %v985
    %1184 = vmatprep.subr.mxu0 0.0
    %1185 = vmatpush1.msra.mxu0 %v986
    %1186 = vmatprep.subr.mxu0 0.0
    %1187 = vmatpush1.msra.mxu0 %v987
    %1188 = vmatprep.subr.mxu0 0.0
    %1189 = vmatpush1.msra.mxu0 %v988
    %1190 = vmatprep.subr.mxu0 0.0
    %1191 = vmatpush1.msra.mxu0 %v989
    %1192 = vmatprep.subr.mxu0 0.0
    %1193 = vmatpush1.msra.mxu0 %v990
    %1194 = vmatprep.subr.mxu0 0.0
    %1195 = vmatpush1.msra.mxu0 %v991
    %1196 = vmatprep.subr.mxu0 0.0
    %1197 = vmatpush1.msra.mxu0 %v992
    %1198 = vmatprep.subr.mxu0 0.0
    %1199 = vmatpush1.msra.mxu0 %v993
    %1200 = vmatprep.subr.mxu0 0.0
    %1201 = vmatpush1.msra.mxu0 %v994
    %1202 = vmatprep.subr.mxu0 0.0
    %1203 = vmatpush1.msra.mxu0 %v995
    %1204 = vmatprep.subr.mxu0 0.0
    %1205 = vmatpush1.msra.mxu0 %v996
    %1206 = vmatprep.subr.mxu0 0.0
    %1207 = vmatpush1.msra.mxu0 %v997
    %1208 = vmatprep.mubr.f32.mxu0 %v921
    %1209 = vmatmul.mubr.f32.gmra.mrb[0].mxu0 %v920
    %v1210 = vpop.f32.mrb[0].mxu0
    %v1211 = vadd.f32 %v1136, %v1210
    %v1212 = vpop.f32.mrb[0].mxu0
    %1213 = vmatprep.mubr.f32.mxu0 %v929
    %1214 = vmatmul.mubr.f32.gmra.mrb[0].mxu0 %v928
    %v1215 = vpop.f32.mrb[0].mxu0
    %v1216 = vadd.f32 %v1141, %v1215
    %v1217 = vpop.f32.mrb[0].mxu0
    %1218 = vdwg.mxu0
    %1219 = vmatprep.subr.mxu0 0.0
    %1220 = vmatpush1.msra.mxu0 %v998
    %1221 = vmatprep.subr.mxu0 0.0
    %1222 = vmatpush1.msra.mxu0 %v999
    %1223 = vmatprep.subr.mxu0 0.0
    %1224 = vmatpush1.msra.mxu0 %v1000
    %1225 = vmatprep.subr.mxu0 0.0
    %1226 = vmatpush1.msra.mxu0 %v1001
    %1227 = vmatprep.subr.mxu0 0.0
    %1228 = vmatpush1.msra.mxu0 %v1002
    %1229 = vmatprep.subr.mxu0 0.0
    %1230 = vmatpush1.msra.mxu0 %v1003
    %1231 = vmatprep.subr.mxu0 0.0
    %1232 = vmatpush1.msra.mxu0 %v1004
    %1233 = vmatprep.subr.mxu0 0.0
    %1234 = vmatpush1.msra.mxu0 %v1005
    %1235 = vmatprep.subr.mxu0 0.0
    %1236 = vmatpush1.msra.mxu0 %v1006
    %1237 = vmatprep.subr.mxu0 0.0
    %1238 = vmatpush1.msra.mxu0 %v1007
    %1239 = vmatprep.subr.mxu0 0.0
    %1240 = vmatpush1.msra.mxu0 %v1008
    %1241 = vmatprep.subr.mxu0 0.0
    %1242 = vmatpush1.msra.mxu0 %v1009
    %1243 = vmatprep.subr.mxu0 0.0
    %1244 = vmatpush1.msra.mxu0 %v1010
    %1245 = vmatprep.subr.mxu0 0.0
    %1246 = vmatpush1.msra.mxu0 %v1011
    %1247 = vmatprep.subr.mxu0 0.0
    %1248 = vmatpush1.msra.mxu0 %v1012
    %1249 = vmatprep.subr.mxu0 0.0
    %1250 = vmatpush1.msra.mxu0 %v1013
    %1251 = vmatprep.subr.mxu0 0.0
    %1252 = vmatpush1.msra.mxu0 %v1014
    %1253 = vmatprep.subr.mxu0 0.0
    %1254 = vmatpush1.msra.mxu0 %v1015
    %1255 = vmatprep.subr.mxu0 0.0
    %1256 = vmatpush1.msra.mxu0 %v1016
    %1257 = vmatprep.subr.mxu0 0.0
    %1258 = vmatpush1.msra.mxu0 %v1017
    %1259 = vmatprep.subr.mxu0 0.0
    %1260 = vmatpush1.msra.mxu0 %v1018
    %1261 = vmatprep.subr.mxu0 0.0
    %1262 = vmatpush1.msra.mxu0 %v1019
    %1263 = vmatprep.subr.mxu0 0.0
    %1264 = vmatpush1.msra.mxu0 %v1020
    %1265 = vmatprep.subr.mxu0 0.0
    %1266 = vmatpush1.msra.mxu0 %v1021
    %1267 = vmatprep.subr.mxu0 0.0
    %1268 = vmatpush1.msra.mxu0 %v1022
    %1269 = vmatprep.subr.mxu0 0.0
    %1270 = vmatpush1.msra.mxu0 %v1023
    %1271 = vmatprep.subr.mxu0 0.0
    %1272 = vmatpush1.msra.mxu0 %v1024
    %1273 = vmatprep.subr.mxu0 0.0
    %1274 = vmatpush1.msra.mxu0 %v1025
    %1275 = vmatprep.subr.mxu0 0.0
    %1276 = vmatpush1.msra.mxu0 %v1026
    %1277 = vmatprep.subr.mxu0 0.0
    %1278 = vmatpush1.msra.mxu0 %v1027
    %1279 = vmatprep.subr.mxu0 0.0
    %1280 = vmatpush1.msra.mxu0 %v1028
    %1281 = vmatprep.subr.mxu0 0.0
    %1282 = vmatpush1.msra.mxu0 %v1029
    %1283 = vmatprep.mubr.f32.mxu0 %v923
    %1284 = vmatmul.mubr.f32.gmra.mrb[0].mxu0 %v922
    %v1285 = vpop.f32.mrb[0].mxu0
    %v1286 = vadd.f32 %v1211, %v1285
    %v1287 = vpop.f32.mrb[0].mxu0
    %1288 = vmatprep.mubr.f32.mxu0 %v931
    %1289 = vmatmul.mubr.f32.gmra.mrb[0].mxu0 %v930
    %v1290 = vpop.f32.mrb[0].mxu0
    %v1291 = vadd.f32 %v1216, %v1290
    %v1292 = vpop.f32.mrb[0].mxu0
    %1293 = vdwg.mxu0
    %1294 = vmatprep.subr.mxu0 0.0
    %1295 = vmatpush1.msra.mxu0 %v1030
    %1296 = vmatprep.subr.mxu0 0.0
    %1297 = vmatpush1.msra.mxu0 %v1031
    %1298 = vmatprep.subr.mxu0 0.0
    %1299 = vmatpush1.msra.mxu0 %v1032
    %1300 = vmatprep.subr.mxu0 0.0
    %1301 = vmatpush1.msra.mxu0 %v1033
    %1302 = vmatprep.subr.mxu0 0.0
    %1303 = vmatpush1.msra.mxu0 %v1034
    %1304 = vmatprep.subr.mxu0 0.0
    %1305 = vmatpush1.msra.mxu0 %v1035
    %1306 = vmatprep.subr.mxu0 0.0
    %1307 = vmatpush1.msra.mxu0 %v1036
    %1308 = vmatprep.subr.mxu0 0.0
    %1309 = vmatpush1.msra.mxu0 %v1037
    %1310 = vmatprep.subr.mxu0 0.0
    %1311 = vmatpush1.msra.mxu0 %v1038
    %1312 = vmatprep.subr.mxu0 0.0
    %1313 = vmatpush1.msra.mxu0 %v1039
    %1314 = vmatprep.subr.mxu0 0.0
    %1315 = vmatpush1.msra.mxu0 %v1040
    %1316 = vmatprep.subr.mxu0 0.0
    %1317 = vmatpush1.msra.mxu0 %v1041
    %1318 = vmatprep.subr.mxu0 0.0
    %1319 = vmatpush1.msra.mxu0 %v1042
    %1320 = vmatprep.subr.mxu0 0.0
    %1321 = vmatpush1.msra.mxu0 %v1043
    %1322 = vmatprep.subr.mxu0 0.0
    %1323 = vmatpush1.msra.mxu0 %v1044
    %1324 = vmatprep.subr.mxu0 0.0
    %1325 = vmatpush1.msra.mxu0 %v1045
    %1326 = vmatprep.subr.mxu0 0.0
    %1327 = vmatpush1.msra.mxu0 %v1046
    %1328 = vmatprep.subr.mxu0 0.0
    %1329 = vmatpush1.msra.mxu0 %v1047
    %1330 = vmatprep.subr.mxu0 0.0
    %1331 = vmatpush1.msra.mxu0 %v1048
    %1332 = vmatprep.subr.mxu0 0.0
    %1333 = vmatpush1.msra.mxu0 %v1049
    %1334 = vmatprep.subr.mxu0 0.0
    %1335 = vmatpush1.msra.mxu0 %v1050
    %1336 = vmatprep.subr.mxu0 0.0
    %1337 = vmatpush1.msra.mxu0 %v1051
    %1338 = vmatprep.subr.mxu0 0.0
    %1339 = vmatpush1.msra.mxu0 %v1052
    %1340 = vmatprep.subr.mxu0 0.0
    %1341 = vmatpush1.msra.mxu0 %v1053
    %1342 = vmatprep.subr.mxu0 0.0
    %1343 = vmatpush1.msra.mxu0 %v1054
    %1344 = vmatprep.subr.mxu0 0.0
    %1345 = vmatpush1.msra.mxu0 %v1055
    %1346 = vmatprep.subr.mxu0 0.0
    %1347 = vmatpush1.msra.mxu0 %v1056
    %1348 = vmatprep.subr.mxu0 0.0
    %1349 = vmatpush1.msra.mxu0 %v1057
    %1350 = vmatprep.subr.mxu0 0.0
    %1351 = vmatpush1.msra.mxu0 %v1058
    %1352 = vmatprep.subr.mxu0 0.0
    %1353 = vmatpush1.msra.mxu0 %v1059
    %1354 = vmatprep.subr.mxu0 0.0
    %1355 = vmatpush1.msra.mxu0 %v1060
    %1356 = vmatprep.subr.mxu0 0.0
    %1357 = vmatpush1.msra.mxu0 %v1061
    %1358 = vmatprep.mubr.f32.mxu0 %v925
    %1359 = vmatmul.mubr.f32.gmra.mrb[0].mxu0 %v924
    %v1360 = vpop.f32.mrb[0].mxu0
    %v1361 = vadd.f32 %v1286, %v1360
    %v1362 = vpop.f32.mrb[0].mxu0
    %1363 = vmatprep.mubr.f32.mxu0 %v933
    %1364 = vmatmul.mubr.f32.gmra.mrb[0].mxu0 %v932
    %v1365 = vpop.f32.mrb[0].mxu0
    %v1366 = vadd.f32 %v1291, %v1365
    %v1367 = vpop.f32.mrb[0].mxu0
    %1368 = vdwg.mxu0
    %vm1369 = vcmp.ge.f32.partialorder %v1361, 0.0
    %vm1370 = vcmp.ge.f32.partialorder %v1366, 0.0
    %v1371 = vmul.f32 %v1361, 0.01
    %v1372 = vmul.f32 %v1366, 0.01
    %v1373 = vsel %vm1369, %v1361, %v1371
    %v1374 = vsel %vm1370, %v1366, %v1372
    %v1375 = vsub.f32 %v1373, %v1374
    %v1376 = vld [vmem:[%s8] sm:$0x1]
    %v1378 = vlaneseq
    %v1379 = vshrl.u32 %v1378, 7
    %v1380 = vsub.s32 0, %v1379
    %v1381 = vrot.slane %v1376, %v1380
    %v1383 = vmul.f32 %v1375, %v1381
    %1384 = vadd.xlane.f32.xlu0 %v1383
    %v1385 = vpop.xlane.xlu0 %1384
    %vm1386 = vcmask 7168
    %1387 = vst.msk [vmem:[%s9] sm:$0xff] %vm1386, %v1385
    // Predicated region
    $region62: #{tpu_custom_call.1} parent=1 // pred_check
      _
    $region63: #{tpu_custom_call.1} parent=1 // pred_check_branch
      %1389 = sbr.rel (0) target = $region65
    $region64: #{tpu_custom_call.1} parent=1 // pred_region
      _
    $region65: #{tpu_custom_call.1} parent=1 // pred_fallthru
      _
    // Predicated region
    $region66: #{tpu_custom_call.1} parent=1 // pred_check
      _
    $region67: #{tpu_custom_call.1} parent=1 // pred_check_branch
      %1391 = sbr.rel (0) target = $region69
    $region68: #{tpu_custom_call.1} parent=1 // pred_region
      _
    $region69: #{tpu_custom_call.1} parent=1 // pred_fallthru
      _
    %1392 = vsyncpa [#allocation3], 1
    %1393 = vsyncpa [#allocation5], 1
    %1394 = vsyncpa [#allocation8], 1
    %1395 = vsyncpa [#allocation11], 1

</llo_original>
